<compile_context>
chip_gen: v6e
topology: v6e:2x2x1
jax: 0.10.0
libtpu: 0.0.40
codegen_flags: <defaults>
</compile_context>

<pallas_src>
import functools

import jax
import jax.numpy as jnp
from jax.experimental import pallas as pl
from jax.experimental.pallas import tpu as pltpu


def _gated_matmul_kernel(w_ref, b_ref, cols_ref, o_ref, *, c_out):
    # w_ref   : (2*C_out, KC)   combined [conv; gate] weights, KC = KH*KW*C_in
    # b_ref   : (2*C_out, 1)    combined bias
    # cols_ref: (1, KC, HW)     im2col'd patches for one image (HW on lanes)
    # o_ref   : (1, C_out, HW)  gated output (lane-dense)
    cols = cols_ref[0]                                        # (KC, HW)
    acc = jnp.dot(w_ref[...], cols,
                  preferred_element_type=jnp.float32)         # one MXU matmul
    acc = acc + b_ref[...].astype(jnp.float32)                # (2*C_out, HW)
    conv = acc[:c_out]
    gate = jax.nn.sigmoid(acc[c_out:])
    o_ref[0] = (conv * gate).astype(o_ref.dtype)


def gated_block(x_nchw, w_conv, b_conv, w_gate, b_gate, *, stride, padding):
    """GatedBlock forward (Conv2d path). x_nchw: (N, C_in, H, W); returns NCHW."""
    N, C_in, H, W = x_nchw.shape
    C_out, _, KH, KW = w_conv.shape
    H_out = (H + 2 * padding - KH) // stride + 1
    W_out = (W + 2 * padding - KW) // stride + 1
    HW = H_out * W_out
    KC = C_in * KH * KW

    # --- wrapper layout plumbing: im2col (HW last => lane-dense) ---
    x_pad = jnp.pad(x_nchw,
                    ((0, 0), (0, 0), (padding, padding), (padding, padding)))
    taps = []
    for kh in range(KH):
        for kw in range(KW):
            taps.append(x_pad[:, :,
                              kh:kh + (H_out - 1) * stride + 1:stride,
                              kw:kw + (W_out - 1) * stride + 1:stride])
    cols = jnp.stack(taps, axis=2)              # (N, C_in, KH*KW, H_out, W_out)
    cols = cols.reshape(N, KC, HW)              # contraction index = c*9+kh*3+kw

    # Fuse conv + gate weights: same flattening order (C_in, KH, KW) as cols.
    w_comb = jnp.concatenate([w_conv.reshape(C_out, KC),
                              w_gate.reshape(C_out, KC)], axis=0)   # (2C, KC)
    b_comb = jnp.concatenate([b_conv, b_gate]).reshape(2 * C_out, 1)

    kernel = functools.partial(_gated_matmul_kernel, c_out=C_out)
    out_flat = pl.pallas_call(
        kernel,
        out_shape=jax.ShapeDtypeStruct((N, C_out, HW), x_nchw.dtype),
        grid_spec=pltpu.PrefetchScalarGridSpec(
            num_scalar_prefetch=0,
            grid=(N,),  # one image per grid step
            in_specs=[
                pl.BlockSpec((2 * C_out, KC), lambda n: (0, 0)),
                pl.BlockSpec((2 * C_out, 1), lambda n: (0, 0)),
                pl.BlockSpec((1, KC, HW), lambda n: (n, 0, 0)),
            ],
            out_specs=pl.BlockSpec((1, C_out, HW), lambda n: (n, 0, 0)),
        ),
        compiler_params=pltpu.CompilerParams(
            dimension_semantics=("parallel",)),
    )(w_comb, b_comb, cols)

    # (N, C_out, HW) -> NCHW with a pure reshape (no transpose needed).
    return out_flat.reshape(N, C_out, H_out, W_out)


def init_encoder_params(key, conv_dim=16, c_in=1, num_repeat=3):
    """Deterministic synthetic parameters matching Encoder's Conv2d shapes."""
    params = []
    ci, co = c_in, conv_dim
    for _ in range(num_repeat):
        key, kwc, kbc, kwg, kbg = jax.random.split(key, 5)
        scale = 1.0 / float(ci * 9) ** 0.5
        wc = scale * jax.random.normal(kwc, (co, ci, 3, 3), jnp.float32)
        bc = scale * jax.random.normal(kbc, (co,), jnp.float32)
        wg = scale * jax.random.normal(kwg, (co, ci, 3, 3), jnp.float32)
        bg = scale * jax.random.normal(kbg, (co,), jnp.float32)
        params.append((wc, bc, wg, bg))
        ci, co = co, co * 2
    return params


@jax.jit
def encoder(x, params):
    h = x
    for (wc, bc, wg, bg) in params:
        h = gated_block(h, wc, bc, wg, bg, stride=1, padding=1)
    return h


# ---------------- pure-JAX reference (PyTorch semantics) ----------------
def _gated_block_ref(x, wc, bc, wg, bg, *, stride, padding):
    dn = jax.lax.conv_dimension_numbers(x.shape, wc.shape,
                                        ('NCHW', 'OIHW', 'NCHW'))
    pads = [(padding, padding), (padding, padding)]
    conv = jax.lax.conv_general_dilated(x, wc, (stride, stride), pads,
                                        dimension_numbers=dn)
    conv = conv + bc[None, :, None, None]
    gate = jax.lax.conv_general_dilated(x, wg, (stride, stride), pads,
                                        dimension_numbers=dn)
    gate = jax.nn.sigmoid(gate + bg[None, :, None, None])
    return conv * gate


def encoder_ref(x, params):
    h = x
    for (wc, bc, wg, bg) in params:
        h = _gated_block_ref(h, wc, bc, wg, bg, stride=1, padding=1)
    return h


if __name__ == "__main__":
    # Encoder(conv_dim=16, c_in=1, num_repeat=3, block_type='normal') applied
    # to a (2, 1, 16, 16) NCHW input -> output (2, 64, 16, 16).
    N, C_IN, H, W = 2, 1, 16, 16
    CONV_DIM, NUM_REPEAT = 16, 3

    key = jax.random.PRNGKey(0)
    key, kx = jax.random.split(key)
    x = jax.random.normal(kx, (N, C_IN, H, W), dtype=jnp.float32)
    params = init_encoder_params(key, conv_dim=CONV_DIM, c_in=C_IN,
                                 num_repeat=NUM_REPEAT)

    out = encoder(x, params)
    out = jax.block_until_ready(out)

    ref = encoder_ref(x, params)
    ref = jax.block_until_ready(ref)

    assert out.shape == (N, CONV_DIM * 4, H, W), out.shape
    assert jnp.allclose(out, ref, atol=2e-4, rtol=2e-4), \
        float(jnp.max(jnp.abs(out - ref)))

    print("KERNEL_OK")
</pallas_src>

<mosaic_0001>
module attributes {stable_mosaic.version = 11 : i64} {
  func.func @_gated_matmul_kernel(%arg0: i32, %arg1: memref<32x9xf32, #tpu.memory_space<vmem>>, %arg2: memref<32x1xf32, #tpu.memory_space<vmem>>, %arg3: memref<1x9x256xf32, #tpu.memory_space<vmem>>, %arg4: memref<1x16x256xf32, #tpu.memory_space<vmem>>) attributes {dimension_semantics = [#tpu.dimension_semantics<parallel>], iteration_bounds = array<i64: 2>, scalar_prefetch = 0 : i64, scratch_operands = 0 : i64, tpu.core_type = #tpu.core_type<tc>, window_params = [{pipeline_mode = #tpu.pipeline_mode<synchronous>, transform_indices = @transform_0, window_bounds = array<i64: 32, 9>}, {pipeline_mode = #tpu.pipeline_mode<synchronous>, transform_indices = @transform_1, window_bounds = array<i64: 32, 1>}, {transform_indices = @transform_2, window_bounds = array<i64: 1, 9, 256>}, {transform_indices = @transform_3, window_bounds = array<i64: 1, 16, 256>}]} {
    %c0 = arith.constant 0 : index
    %c0_0 = arith.constant 0 : index
    %c0_1 = arith.constant 0 : index
    %0 = vector.load %arg3[%c0, %c0_0, %c0_1] : memref<1x9x256xf32, #tpu.memory_space<vmem>>, vector<1x9x256xf32>
    %1 = vector.shape_cast %0 : vector<1x9x256xf32> to vector<9x256xf32>
    %c0_2 = arith.constant 0 : index
    %c0_3 = arith.constant 0 : index
    %2 = vector.load %arg1[%c0_2, %c0_3] : memref<32x9xf32, #tpu.memory_space<vmem>>, vector<32x9xf32>
    %cst = arith.constant dense<0.000000e+00> : vector<32x256xf32>
    %3 = tpu.matmul %2, %1, %cst {dimension_numbers = #tpu.dot_dimension_numbers<[1], [0], [0], [1], [0, 0, 1, 1], [], []>} : vector<32x9xf32>, vector<9x256xf32>, vector<32x256xf32> -> vector<32x256xf32>
    %c0_4 = arith.constant 0 : index
    %c0_5 = arith.constant 0 : index
    %4 = vector.load %arg2[%c0_4, %c0_5] : memref<32x1xf32, #tpu.memory_space<vmem>>, vector<32x1xf32>
    %5 = vector.broadcast %4 : vector<32x1xf32> to vector<32x256xf32>
    %6 = arith.addf %3, %5 : vector<32x256xf32>
    %7 = vector.extract_strided_slice %6 {offsets = [0, 0], sizes = [16, 256], strides = [1, 1]} : vector<32x256xf32> to vector<16x256xf32>
    %8 = vector.extract_strided_slice %6 {offsets = [16, 0], sizes = [16, 256], strides = [1, 1]} : vector<32x256xf32> to vector<16x256xf32>
    %9 = arith.negf %8 : vector<16x256xf32>
    %10 = math.exp %9 : vector<16x256xf32>
    %cst_6 = arith.constant 1.000000e+00 : f32
    %11 = vector.broadcast %cst_6 : f32 to vector<16x256xf32>
    %12 = arith.addf %11, %10 : vector<16x256xf32>
    %13 = arith.divf %11, %12 : vector<16x256xf32>
    %14 = arith.mulf %7, %13 : vector<16x256xf32>
    %c0_7 = arith.constant 0 : index
    %c0_8 = arith.constant 0 : index
    %c0_9 = arith.constant 0 : index
    %15 = vector.load %arg4[%c0_7, %c0_8, %c0_9] : memref<1x16x256xf32, #tpu.memory_space<vmem>>, vector<1x16x256xf32>
    %16 = vector.shape_cast %15 : vector<1x16x256xf32> to vector<16x256xf32>
    %17 = vector.shape_cast %14 : vector<16x256xf32> to vector<1x16x256xf32>
    tpu.vector_store %arg4[%c0_7, %c0_8, %c0_9], %17 {strides = array<i32>} : memref<1x16x256xf32, #tpu.memory_space<vmem>>, vector<1x16x256xf32>,
    return
  }
  func.func @transform_0(%arg0: i32) -> (i32, i32) {
    %c0_i32 = arith.constant 0 : i32
    %c0_i32_0 = arith.constant 0 : i32
    %c0_i32_1 = arith.constant 0 : i32
    return %c0_i32, %c0_i32_0 : i32, i32
  }
  func.func @transform_1(%arg0: i32) -> (i32, i32) {
    %c0_i32 = arith.constant 0 : i32
    %c0_i32_0 = arith.constant 0 : i32
    %c0_i32_1 = arith.constant 0 : i32
    return %c0_i32, %c0_i32_0 : i32, i32
  }
  func.func @transform_2(%arg0: i32) -> (i32, i32, i32) {
    %c0_i32 = arith.constant 0 : i32
    %c0_i32_0 = arith.constant 0 : i32
    %c0_i32_1 = arith.constant 0 : i32
    return %arg0, %c0_i32, %c0_i32_0 : i32, i32, i32
  }
  func.func @transform_3(%arg0: i32) -> (i32, i32, i32) {
    %c0_i32 = arith.constant 0 : i32
    %c0_i32_0 = arith.constant 0 : i32
    %c0_i32_1 = arith.constant 0 : i32
    return %arg0, %c0_i32, %c0_i32_0 : i32, i32, i32
  }
}

module attributes {stable_mosaic.version = 11 : i64} {
  func.func @_gated_matmul_kernel(%arg0: i32, %arg1: memref<64x144xf32, #tpu.memory_space<vmem>>, %arg2: memref<64x1xf32, #tpu.memory_space<vmem>>, %arg3: memref<1x144x256xf32, #tpu.memory_space<vmem>>, %arg4: memref<1x32x256xf32, #tpu.memory_space<vmem>>) attributes {dimension_semantics = [#tpu.dimension_semantics<parallel>], iteration_bounds = array<i64: 2>, scalar_prefetch = 0 : i64, scratch_operands = 0 : i64, tpu.core_type = #tpu.core_type<tc>, window_params = [{pipeline_mode = #tpu.pipeline_mode<synchronous>, transform_indices = @transform_0, window_bounds = array<i64: 64, 144>}, {pipeline_mode = #tpu.pipeline_mode<synchronous>, transform_indices = @transform_1, window_bounds = array<i64: 64, 1>}, {transform_indices = @transform_2, window_bounds = array<i64: 1, 144, 256>}, {transform_indices = @transform_3, window_bounds = array<i64: 1, 32, 256>}]} {
    %c0 = arith.constant 0 : index
    %c0_0 = arith.constant 0 : index
    %c0_1 = arith.constant 0 : index
    %0 = vector.load %arg3[%c0, %c0_0, %c0_1] : memref<1x144x256xf32, #tpu.memory_space<vmem>>, vector<1x144x256xf32>
    %1 = vector.shape_cast %0 : vector<1x144x256xf32> to vector<144x256xf32>
    %c0_2 = arith.constant 0 : index
    %c0_3 = arith.constant 0 : index
    %2 = vector.load %arg1[%c0_2, %c0_3] : memref<64x144xf32, #tpu.memory_space<vmem>>, vector<64x144xf32>
    %cst = arith.constant dense<0.000000e+00> : vector<64x256xf32>
    %3 = tpu.matmul %2, %1, %cst {dimension_numbers = #tpu.dot_dimension_numbers<[1], [0], [0], [1], [0, 0, 1, 1], [], []>} : vector<64x144xf32>, vector<144x256xf32>, vector<64x256xf32> -> vector<64x256xf32>
    %c0_4 = arith.constant 0 : index
    %c0_5 = arith.constant 0 : index
    %4 = vector.load %arg2[%c0_4, %c0_5] : memref<64x1xf32, #tpu.memory_space<vmem>>, vector<64x1xf32>
    %5 = vector.broadcast %4 : vector<64x1xf32> to vector<64x256xf32>
    %6 = arith.addf %3, %5 : vector<64x256xf32>
    %7 = vector.extract_strided_slice %6 {offsets = [0, 0], sizes = [32, 256], strides = [1, 1]} : vector<64x256xf32> to vector<32x256xf32>
    %8 = vector.extract_strided_slice %6 {offsets = [32, 0], sizes = [32, 256], strides = [1, 1]} : vector<64x256xf32> to vector<32x256xf32>
    %9 = arith.negf %8 : vector<32x256xf32>
    %10 = math.exp %9 : vector<32x256xf32>
    %cst_6 = arith.constant 1.000000e+00 : f32
    %11 = vector.broadcast %cst_6 : f32 to vector<32x256xf32>
    %12 = arith.addf %11, %10 : vector<32x256xf32>
    %13 = arith.divf %11, %12 : vector<32x256xf32>
    %14 = arith.mulf %7, %13 : vector<32x256xf32>
    %c0_7 = arith.constant 0 : index
    %c0_8 = arith.constant 0 : index
    %c0_9 = arith.constant 0 : index
    %15 = vector.load %arg4[%c0_7, %c0_8, %c0_9] : memref<1x32x256xf32, #tpu.memory_space<vmem>>, vector<1x32x256xf32>
    %16 = vector.shape_cast %15 : vector<1x32x256xf32> to vector<32x256xf32>
    %17 = vector.shape_cast %14 : vector<32x256xf32> to vector<1x32x256xf32>
    tpu.vector_store %arg4[%c0_7, %c0_8, %c0_9], %17 {strides = array<i32>} : memref<1x32x256xf32, #tpu.memory_space<vmem>>, vector<1x32x256xf32>,
    return
  }
  func.func @transform_0(%arg0: i32) -> (i32, i32) {
    %c0_i32 = arith.constant 0 : i32
    %c0_i32_0 = arith.constant 0 : i32
    %c0_i32_1 = arith.constant 0 : i32
    return %c0_i32, %c0_i32_0 : i32, i32
  }
  func.func @transform_1(%arg0: i32) -> (i32, i32) {
    %c0_i32 = arith.constant 0 : i32
    %c0_i32_0 = arith.constant 0 : i32
    %c0_i32_1 = arith.constant 0 : i32
    return %c0_i32, %c0_i32_0 : i32, i32
  }
  func.func @transform_2(%arg0: i32) -> (i32, i32, i32) {
    %c0_i32 = arith.constant 0 : i32
    %c0_i32_0 = arith.constant 0 : i32
    %c0_i32_1 = arith.constant 0 : i32
    return %arg0, %c0_i32, %c0_i32_0 : i32, i32, i32
  }
  func.func @transform_3(%arg0: i32) -> (i32, i32, i32) {
    %c0_i32 = arith.constant 0 : i32
    %c0_i32_0 = arith.constant 0 : i32
    %c0_i32_1 = arith.constant 0 : i32
    return %arg0, %c0_i32, %c0_i32_0 : i32, i32, i32
  }
}

module attributes {stable_mosaic.version = 11 : i64} {
  func.func @_gated_matmul_kernel(%arg0: i32, %arg1: memref<128x288xf32, #tpu.memory_space<vmem>>, %arg2: memref<128x1xf32, #tpu.memory_space<vmem>>, %arg3: memref<1x288x256xf32, #tpu.memory_space<vmem>>, %arg4: memref<1x64x256xf32, #tpu.memory_space<vmem>>) attributes {dimension_semantics = [#tpu.dimension_semantics<parallel>], iteration_bounds = array<i64: 2>, scalar_prefetch = 0 : i64, scratch_operands = 0 : i64, tpu.core_type = #tpu.core_type<tc>, window_params = [{pipeline_mode = #tpu.pipeline_mode<synchronous>, transform_indices = @transform_0, window_bounds = array<i64: 128, 288>}, {pipeline_mode = #tpu.pipeline_mode<synchronous>, transform_indices = @transform_1, window_bounds = array<i64: 128, 1>}, {transform_indices = @transform_2, window_bounds = array<i64: 1, 288, 256>}, {transform_indices = @transform_3, window_bounds = array<i64: 1, 64, 256>}]} {
    %c0 = arith.constant 0 : index
    %c0_0 = arith.constant 0 : index
    %c0_1 = arith.constant 0 : index
    %0 = vector.load %arg3[%c0, %c0_0, %c0_1] : memref<1x288x256xf32, #tpu.memory_space<vmem>>, vector<1x288x256xf32>
    %1 = vector.shape_cast %0 : vector<1x288x256xf32> to vector<288x256xf32>
    %c0_2 = arith.constant 0 : index
    %c0_3 = arith.constant 0 : index
    %2 = vector.load %arg1[%c0_2, %c0_3] : memref<128x288xf32, #tpu.memory_space<vmem>>, vector<128x288xf32>
    %cst = arith.constant dense<0.000000e+00> : vector<128x256xf32>
    %3 = tpu.matmul %2, %1, %cst {dimension_numbers = #tpu.dot_dimension_numbers<[1], [0], [0], [1], [0, 0, 1, 1], [], []>} : vector<128x288xf32>, vector<288x256xf32>, vector<128x256xf32> -> vector<128x256xf32>
    %c0_4 = arith.constant 0 : index
    %c0_5 = arith.constant 0 : index
    %4 = vector.load %arg2[%c0_4, %c0_5] : memref<128x1xf32, #tpu.memory_space<vmem>>, vector<128x1xf32>
    %5 = vector.broadcast %4 : vector<128x1xf32> to vector<128x256xf32>
    %6 = arith.addf %3, %5 : vector<128x256xf32>
    %7 = vector.extract_strided_slice %6 {offsets = [0, 0], sizes = [64, 256], strides = [1, 1]} : vector<128x256xf32> to vector<64x256xf32>
    %8 = vector.extract_strided_slice %6 {offsets = [64, 0], sizes = [64, 256], strides = [1, 1]} : vector<128x256xf32> to vector<64x256xf32>
    %9 = arith.negf %8 : vector<64x256xf32>
    %10 = math.exp %9 : vector<64x256xf32>
    %cst_6 = arith.constant 1.000000e+00 : f32
    %11 = vector.broadcast %cst_6 : f32 to vector<64x256xf32>
    %12 = arith.addf %11, %10 : vector<64x256xf32>
    %13 = arith.divf %11, %12 : vector<64x256xf32>
    %14 = arith.mulf %7, %13 : vector<64x256xf32>
    %c0_7 = arith.constant 0 : index
    %c0_8 = arith.constant 0 : index
    %c0_9 = arith.constant 0 : index
    %15 = vector.load %arg4[%c0_7, %c0_8, %c0_9] : memref<1x64x256xf32, #tpu.memory_space<vmem>>, vector<1x64x256xf32>
    %16 = vector.shape_cast %15 : vector<1x64x256xf32> to vector<64x256xf32>
    %17 = vector.shape_cast %14 : vector<64x256xf32> to vector<1x64x256xf32>
    tpu.vector_store %arg4[%c0_7, %c0_8, %c0_9], %17 {strides = array<i32>} : memref<1x64x256xf32, #tpu.memory_space<vmem>>, vector<1x64x256xf32>,
    return
  }
  func.func @transform_0(%arg0: i32) -> (i32, i32) {
    %c0_i32 = arith.constant 0 : i32
    %c0_i32_0 = arith.constant 0 : i32
    %c0_i32_1 = arith.constant 0 : i32
    return %c0_i32, %c0_i32_0 : i32, i32
  }
  func.func @transform_1(%arg0: i32) -> (i32, i32) {
    %c0_i32 = arith.constant 0 : i32
    %c0_i32_0 = arith.constant 0 : i32
    %c0_i32_1 = arith.constant 0 : i32
    return %c0_i32, %c0_i32_0 : i32, i32
  }
  func.func @transform_2(%arg0: i32) -> (i32, i32, i32) {
    %c0_i32 = arith.constant 0 : i32
    %c0_i32_0 = arith.constant 0 : i32
    %c0_i32_1 = arith.constant 0 : i32
    return %arg0, %c0_i32, %c0_i32_0 : i32, i32, i32
  }
  func.func @transform_3(%arg0: i32) -> (i32, i32, i32) {
    %c0_i32 = arith.constant 0 : i32
    %c0_i32_0 = arith.constant 0 : i32
    %c0_i32_1 = arith.constant 0 : i32
    return %arg0, %c0_i32, %c0_i32_0 : i32, i32, i32
  }
}

</mosaic_0001>

<llo_original>
// kernel: encoder.3
$region0: #{encoder.3}
  #allocation0 [shape = 'u32[]', space=smem, size = 0x4, offset = 0x4, fixed_abs, tag = 'smem constant byte address 0x4 - core index']
  #allocation1 [shape = 'u32[144,128]{1,0:T(1,128)}', space=vmem, size = 0x12000, scoped, tag = 'internal scratch']
  %s0 = inlined_call_operand.vmem [shape: f32[32,9], index: 0, kind: input, shape index: {}]
  %s1 = inlined_call_operand.vmem [shape: f32[32,1], index: 1, kind: input, shape index: {}]
  %s2 = inlined_call_operand.vmem [shape: f32[2,9,256], index: 2, kind: input, shape index: {}]
  %s3 = inlined_call_operand.vmem [shape: f32[2,16,256], index: 3, kind: output, shape index: {}]
  %s4 = sld [smem:[#allocation0]]
  $region45: #{encoder.3} parent=0
    _
  %s6 = ssub.s32 1, %s4
  %s7 = scalar_select 0, %s6, %s4
  loop: start=0, step=1, limit=4
  $region2: #{encoder.3} parent=0 // loop_pre_header
    _
  $region3: #{encoder.3} parent=0 // loop_header
    %s9 = sphi 0, %s13
    %p10 = scmp.ge.s32.totalorder %s9, 4
    %s17 = sphi 0, %s17
    %s19 = sphi 0, %s17
    %s20 = sphi 0, %s19
    %s34 = sphi 0, %s20
    %s38 = sphi 0, %s38
    %s40 = sphi 0, %s38
    %s41 = sphi 0, %s40
    %s55 = sphi 0, %s41
    %s61 = sphi 0, %s63
    %s64 = sphi 0, %s61
    %s65 = sphi 0, %s64
    %s81 = sphi 0, %s65
    %s87 = sphi 0, %s89
    %s90 = sphi 0, %s87
    %s91 = sphi 0, %s90
    %s107 = sphi 0, %s91
  $region4: #{encoder.3} parent=0 // loop_header_branch
    %12 = sbr.rel (%p10) target = $region8
  $region5: #{encoder.3} parent=0 // loop_body
    %s14 = ssub.s32 %s9, 1
    %s15 = ssub.s32 %s9, 2
    %s16 = sadd.s32 %s9, 1
    %s18 = sadd.s32 %s17, 1
    %p21 = scmp.eq.s32.totalorder %s9, 1
    %p22 = scmp.ne.s32.totalorder %s17, %s19
    %p23 = scmp.eq.s32.totalorder %s9, 0
    %p24 = por %p22, %p23
    %p25 = scmp.ne.s32.totalorder %s17, %s19
    %p26 = scmp.eq.s32.totalorder %s14, 1
    %p27 = por %p25, %p26
    %p28 = scmp.ne.s32.totalorder %s19, %s20
    %p29 = scmp.eq.s32.totalorder %s14, 0
    %p30 = por %p28, %p29
    %p31 = scmp.ne.s32.totalorder %s19, %s20
    %p32 = scmp.eq.s32.totalorder %s15, 1
    %p33 = por %p31, %p32
    %p35 = scmp.ne.s32.totalorder %s20, %s34
    %p36 = scmp.eq.s32.totalorder %s15, 0
    %p37 = por %p35, %p36
    %s39 = sadd.s32 %s38, 1
    %p42 = scmp.eq.s32.totalorder %s9, 1
    %p43 = scmp.ne.s32.totalorder %s38, %s40
    %p44 = scmp.eq.s32.totalorder %s9, 0
    %p45 = por %p43, %p44
    %p46 = scmp.ne.s32.totalorder %s38, %s40
    %p47 = scmp.eq.s32.totalorder %s14, 1
    %p48 = por %p46, %p47
    %p49 = scmp.ne.s32.totalorder %s40, %s41
    %p50 = scmp.eq.s32.totalorder %s14, 0
    %p51 = por %p49, %p50
    %p52 = scmp.ne.s32.totalorder %s40, %s41
    %p53 = scmp.eq.s32.totalorder %s15, 1
    %p54 = por %p52, %p53
    %p56 = scmp.ne.s32.totalorder %s41, %s55
    %p57 = scmp.eq.s32.totalorder %s15, 0
    %p58 = por %p56, %p57
    %s59 = ssub.s32 %s9, %s16
    %p60 = scmp.eq.s32.totalorder %s59, 0
    %s62 = sadd.s32 %s61, 1
    %s63 = scalar_select %p60, %s61, %s62
    %p66 = pneg %p60
    %p67 = scmp.eq.s32.totalorder %s9, 1
    %p68 = por %p66, %p67
    %p69 = scmp.ne.s32.totalorder %s61, %s64
    %p70 = scmp.eq.s32.totalorder %s9, 0
    %p71 = por %p69, %p70
    %p72 = scmp.ne.s32.totalorder %s61, %s64
    %p73 = scmp.eq.s32.totalorder %s14, 1
    %p74 = por %p72, %p73
    %p75 = scmp.ne.s32.totalorder %s64, %s65
    %p76 = scmp.eq.s32.totalorder %s14, 0
    %p77 = por %p75, %p76
    %p78 = scmp.ne.s32.totalorder %s64, %s65
    %p79 = scmp.eq.s32.totalorder %s15, 1
    %p80 = por %p78, %p79
    %p82 = scmp.ne.s32.totalorder %s65, %s81
    %p83 = scmp.eq.s32.totalorder %s15, 0
    %p84 = por %p82, %p83
    %s85 = ssub.s32 %s9, %s16
    %p86 = scmp.eq.s32.totalorder %s85, 0
    %s88 = sadd.s32 %s87, 1
    %s89 = scalar_select %p86, %s87, %s88
    %p92 = pneg %p86
    %p93 = scmp.eq.s32.totalorder %s9, 1
    %p94 = por %p92, %p93
    %p95 = scmp.ne.s32.totalorder %s87, %s90
    %p96 = scmp.eq.s32.totalorder %s9, 0
    %p97 = por %p95, %p96
    %p98 = scmp.ne.s32.totalorder %s87, %s90
    %p99 = scmp.eq.s32.totalorder %s14, 1
    %p100 = por %p98, %p99
    %p101 = scmp.ne.s32.totalorder %s90, %s91
    %p102 = scmp.eq.s32.totalorder %s14, 0
    %p103 = por %p101, %p102
    %p104 = scmp.ne.s32.totalorder %s90, %s91
    %p105 = scmp.eq.s32.totalorder %s15, 1
    %p106 = por %p104, %p105
    %p108 = scmp.ne.s32.totalorder %s91, %s107
    %p109 = scmp.eq.s32.totalorder %s15, 0
    %p110 = por %p108, %p109
    %p111 = scmp.le.s32.totalorder 1, %s9
    %p112 = scmp.lt.s32.totalorder %s9, 3
    %p113 = pnand %p111, %p112
    %p114 = pneg %p113
    // Predicated region
    $region9: #{encoder.3} parent=5 // pred_check
      _
    $region10: #{encoder.3} parent=5 // pred_check_branch
      %116 = sbr.rel (%p113) target = $region12
    $region11: #{encoder.3} parent=5 // pred_region
      %s117 = ssub.s32 %s9, 1
      // Predicated region
      $region13: #{encoder.3} parent=11 // pred_check
        %p118 = pneg %p30
      $region14: #{encoder.3} parent=11 // pred_check_branch
        %120 = sbr.rel (%p118) target = $region16
      $region15: #{encoder.3} parent=11 // pred_region
        _
      $region16: #{encoder.3} parent=11 // pred_fallthru
        _
      // Predicated region
      $region17: #{encoder.3} parent=11 // pred_check
        %p121 = pneg %p51
      $region18: #{encoder.3} parent=11 // pred_check_branch
        %123 = sbr.rel (%p121) target = $region20
      $region19: #{encoder.3} parent=11 // pred_region
        _
      $region20: #{encoder.3} parent=11 // pred_fallthru
        _
    $region12: #{encoder.3} parent=5 // pred_fallthru
      _
    %p124 = scmp.lt.s32.totalorder %s9, 2
    // Predicated region
    $region21: #{encoder.3} parent=5 // pred_check
      %p125 = pneg %p124
    $region22: #{encoder.3} parent=5 // pred_check_branch
      %127 = sbr.rel (%p125) target = $region24
    $region23: #{encoder.3} parent=5 // pred_region
      // Predicated region
      $region25: #{encoder.3} parent=23 // pred_check
        %p128 = pneg %p71
      $region26: #{encoder.3} parent=23 // pred_check_branch
        %130 = sbr.rel (%p128) target = $region28
      $region27: #{encoder.3} parent=23 // pred_region
        %p131 = scmp.lt.s32.totalorder %s9, 1
        %s132 = scalar_select %p131, %s9, 1
        %s133 = smul.addr %s132, 4
        %s134 = smul.addr %s133, 8
        %s135 = scalar_lea.vmem %s2, %s134
      $region28: #{encoder.3} parent=23 // pred_fallthru
        _
    $region24: #{encoder.3} parent=5 // pred_fallthru
      _
    %p136 = scmp.le.s32.totalorder 1, %s9
    %p137 = scmp.lt.s32.totalorder %s9, 3
    %p138 = pnand %p136, %p137
    %p139 = pneg %p138
    // Predicated region
    $region29: #{encoder.3} parent=5 // pred_check
      _
    $region30: #{encoder.3} parent=5 // pred_check_branch
      %141 = sbr.rel (%p138) target = $region32
    $region31: #{encoder.3} parent=5 // pred_region
      %s142 = ssub.s32 %s9, 1
      %p143 = pneg %p30
      %p144 = pneg %p27
      %p145 = pneg %p51
      %p146 = pneg %p48
      %p147 = scmp.lt.s32.totalorder %s14, 1
      %s148 = scalar_select %p147, %s14, 1
      %s149 = smul.addr %s148, 4
      %s150 = smul.addr %s149, 8
      %s151 = scalar_lea.vmem %s2, %s150
      %p152 = pneg %p77
      %p153 = pneg %p74
      %p154 = pneg %p103
      %p155 = pneg %p100
      %p156 = scmp.lt.s32.totalorder %s14, 1
      %s157 = scalar_select %p156, %s14, 1
      %s158 = smul.addr %s157, 4
      %s159 = smul.addr %s158, 8
      %s160 = scalar_lea.vmem %s3, %s159
      %p161 = scmp.lt.s32.totalorder %s14, 1
      %s162 = scalar_select %p161, %s14, 1
      %s163 = smul.addr %s162, 4
      %s164 = smul.addr %s163, 8
      %s165 = scalar_lea.vmem %s2, %s164
      %p166 = scmp.lt.s32.totalorder %s14, 1
      %s167 = scalar_select %p166, %s14, 1
      %s168 = smul.addr %s167, 4
      %s169 = smul.addr %s168, 8
      %s170 = scalar_lea.vmem %s3, %s169
      %v171 = vld [vmem:[%s165] sm:$0xff]
      %v172 = vld [vmem:[%s165 + $0x8] sm:$0xff]
      %v173 = vld [vmem:[%s165 + $0x10] sm:$0x1]
      %v174 = vld [vmem:[%s165 + $0x18] sm:$0x1]
      %v175 = vld [vmem:[%s0] sm:$0xff]
      %v176 = vld [vmem:[%s0 + $0x8] sm:$0xff]
      %v177 = vld [vmem:[%s0 + $0x10] sm:$0xff]
      %v178 = vld [vmem:[%s0 + $0x18] sm:$0xff]
      %v179 = vld [vmem:[%s1] sm:$0xff]
      %v180 = vld [vmem:[%s1 + $0x8] sm:$0xff]
      %v181 = vld [vmem:[%s1 + $0x10] sm:$0xff]
      %v182 = vld [vmem:[%s1 + $0x18] sm:$0xff]
      %184 = vset.pattern.permute.xlu0 0
      %185 = vperm.xlu0 %184, %v179
      %v186 = vpop.permute.xlu0 %185
      %189 = vset.pattern.permute.xlu0 0
      %190 = vperm.xlu0 %189, %v180
      %v191 = vpop.permute.xlu0 %190
      %194 = vset.pattern.permute.xlu0 0
      %195 = vperm.xlu0 %194, %v181
      %v196 = vpop.permute.xlu0 %195
      %199 = vset.pattern.permute.xlu0 0
      %200 = vperm.xlu0 %199, %v182
      %v201 = vpop.permute.xlu0 %200
      %vm203 = vcmask 72704
      %v205 = vsel %vm203, %v175, 0
      %v208 = vsel %vm203, %v176, 0
      %v211 = vsel %vm203, %v177, 0
      %v214 = vsel %vm203, %v178, 0
      %vm216 = vcmask 1040384
      %v218 = vsel %vm216, %v173, 0
      %v221 = vsel %vm216, %v174, 0
      %223 = vmatprep.subr.mxu0 0.0
      %224 = vmatpush1.msra.mxu0 0.0
      %225 = vmatprep.subr.mxu0 0.0
      %226 = vmatpush1.msra.mxu0 0.0
      %227 = vmatprep.subr.mxu0 0.0
      %228 = vmatpush1.msra.mxu0 0.0
      %229 = vmatprep.subr.mxu0 0.0
      %230 = vmatpush1.msra.mxu0 0.0
      %231 = vmatprep.subr.mxu0 0.0
      %232 = vmatpush1.msra.mxu0 0.0
      %233 = vmatprep.subr.mxu0 0.0
      %234 = vmatpush1.msra.mxu0 0.0
      %235 = vmatprep.subr.mxu0 0.0
      %236 = vmatpush1.msra.mxu0 0.0
      %237 = vmatprep.subr.mxu0 0.0
      %238 = vmatpush1.msra.mxu0 0.0
      %239 = vmatprep.subr.mxu0 0.0
      %240 = vmatpush1.msra.mxu0 0.0
      %241 = vmatprep.subr.mxu0 0.0
      %242 = vmatpush1.msra.mxu0 0.0
      %243 = vmatprep.subr.mxu0 0.0
      %244 = vmatpush1.msra.mxu0 0.0
      %245 = vmatprep.subr.mxu0 0.0
      %246 = vmatpush1.msra.mxu0 0.0
      %247 = vmatprep.subr.mxu0 0.0
      %248 = vmatpush1.msra.mxu0 0.0
      %249 = vmatprep.subr.mxu0 0.0
      %250 = vmatpush1.msra.mxu0 0.0
      %251 = vmatprep.subr.mxu0 %v221
      %252 = vmatpush1.msra.mxu0 %v218
      %253 = vmatprep.subr.mxu0 %v172
      %254 = vmatpush1.msra.mxu0 %v171
      %255 = vmatprep.subr.mxu0 0.0
      %256 = vmatpush2.msra.mxu0 0.0
      %257 = vmatprep.subr.mxu0 0.0
      %258 = vmatpush2.msra.mxu0 0.0
      %259 = vmatprep.subr.mxu0 0.0
      %260 = vmatpush2.msra.mxu0 0.0
      %261 = vmatprep.subr.mxu0 0.0
      %262 = vmatpush2.msra.mxu0 0.0
      %263 = vmatprep.subr.mxu0 0.0
      %264 = vmatpush2.msra.mxu0 0.0
      %265 = vmatprep.subr.mxu0 0.0
      %266 = vmatpush2.msra.mxu0 0.0
      %267 = vmatprep.subr.mxu0 0.0
      %268 = vmatpush2.msra.mxu0 0.0
      %269 = vmatprep.subr.mxu0 0.0
      %270 = vmatpush2.msra.mxu0 0.0
      %271 = vmatprep.subr.mxu0 0.0
      %272 = vmatpush2.msra.mxu0 0.0
      %273 = vmatprep.subr.mxu0 0.0
      %274 = vmatpush2.msra.mxu0 0.0
      %275 = vmatprep.subr.mxu0 0.0
      %276 = vmatpush2.msra.mxu0 0.0
      %277 = vmatprep.subr.mxu0 0.0
      %278 = vmatpush2.msra.mxu0 0.0
      %279 = vmatprep.subr.mxu0 0.0
      %280 = vmatpush2.msra.mxu0 0.0
      %281 = vmatprep.subr.mxu0 0.0
      %282 = vmatpush2.msra.mxu0 0.0
      %283 = vmatprep.subr.mxu0 0.0
      %284 = vmatpush2.msra.mxu0 0.0
      %285 = vmatprep.subr.mxu0 0.0
      %286 = vmatpush2.msra.mxu0 0.0
      %287 = vmatprep.mubr.f32.mxu0 0.0
      %288 = vmatmul.mubr.f32.gmra.mxu0 %v205
      %v289 = vpop.f32.mrf.mxu0
      %v290 = vadd.f32 %v186, %v289
      %v291 = vpop.f32.mrf.mxu0
      %v292 = vadd.f32 %v186, %v291
      %293 = vmatprep.mubr.f32.mxu0 0.0
      %294 = vmatmul.mubr.f32.gmra.mxu0 %v208
      %v295 = vpop.f32.mrf.mxu0
      %v296 = vadd.f32 %v191, %v295
      %v297 = vpop.f32.mrf.mxu0
      %v298 = vadd.f32 %v191, %v297
      %299 = vmatprep.mubr.f32.mxu0 0.0
      %300 = vmatmul.mubr.f32.gmra.mxu0 %v211
      %v301 = vpop.f32.mrf.mxu0
      %v302 = vadd.f32 %v196, %v301
      %v303 = vpop.f32.mrf.mxu0
      %v304 = vadd.f32 %v196, %v303
      %305 = vmatprep.mubr.f32.mxu0 0.0
      %306 = vmatmul.mubr.f32.gmra.mxu0 %v214
      %v307 = vpop.f32.mrf.mxu0
      %v308 = vadd.f32 %v201, %v307
      %v309 = vpop.f32.mrf.mxu0
      %v310 = vadd.f32 %v201, %v309
      %311 = vdwg.mxu0
      %v312 = vxor.u32 %v302, 2147483648
      %v313 = vxor.u32 %v304, 2147483648
      %v314 = vxor.u32 %v308, 2147483648
      %v315 = vxor.u32 %v310, 2147483648
      %v316 = vmul.f32 %v312, 1.442695
      %v317 = vpow.pop %v316
      %v318 = vmul.f32 %v313, 1.442695
      %v319 = vpow.pop %v318
      %v320 = vmul.f32 %v314, 1.442695
      %v321 = vpow.pop %v320
      %v322 = vmul.f32 %v315, 1.442695
      %v323 = vpow.pop %v322
      %v324 = vadd.f32 %v317, 1.0
      %v325 = vadd.f32 %v319, 1.0
      %v326 = vadd.f32 %v321, 1.0
      %v327 = vadd.f32 %v323, 1.0
      %v328 = vrcp.pop %v324
      %v329 = vmul.f32 1.0, %v328
      %v330 = vrcp.pop %v325
      %v331 = vmul.f32 1.0, %v330
      %v332 = vrcp.pop %v326
      %v333 = vmul.f32 1.0, %v332
      %v334 = vrcp.pop %v327
      %v335 = vmul.f32 1.0, %v334
      %v336 = vmul.f32 %v290, %v329
      %v337 = vmul.f32 %v292, %v331
      %v338 = vmul.f32 %v296, %v333
      %v339 = vmul.f32 %v298, %v335
      %340 = vst [vmem:[%s170] sm:$0xff] %v336
      %341 = vst [vmem:[%s170 + $0x8] sm:$0xff] %v337
      %342 = vst [vmem:[%s170 + $0x10] sm:$0xff] %v338
      %343 = vst [vmem:[%s170 + $0x18] sm:$0xff] %v339
      %p344 = scmp.lt.s32.totalorder %s14, 1
      %s345 = scalar_select %p344, %s14, 1
      %s346 = smul.addr %s345, 4
      %s347 = smul.addr %s346, 8
      %s348 = scalar_lea.vmem %s3, %s347
      // Predicated region
      $region33: #{encoder.3} parent=31 // pred_check
        %p349 = pneg %p100
      $region34: #{encoder.3} parent=31 // pred_check_branch
        %351 = sbr.rel (%p349) target = $region36
      $region35: #{encoder.3} parent=31 // pred_region
        _
      $region36: #{encoder.3} parent=31 // pred_fallthru
        _
    $region32: #{encoder.3} parent=5 // pred_fallthru
      _
    %p352 = scmp.le.s32.totalorder 2, %s9
    // Predicated region
    $region37: #{encoder.3} parent=5 // pred_check
      %p353 = pneg %p352
    $region38: #{encoder.3} parent=5 // pred_check_branch
      %355 = sbr.rel (%p353) target = $region40
    $region39: #{encoder.3} parent=5 // pred_region
      %s356 = ssub.s32 %s9, 2
      // Predicated region
      $region41: #{encoder.3} parent=39 // pred_check
        %p357 = pneg %p106
      $region42: #{encoder.3} parent=39 // pred_check_branch
        %359 = sbr.rel (%p357) target = $region44
      $region43: #{encoder.3} parent=39 // pred_region
        %p360 = scmp.lt.s32.totalorder %s15, 1
        %s361 = scalar_select %p360, %s15, 1
        %s362 = smul.addr %s361, 4
        %s363 = smul.addr %s362, 8
        %s364 = scalar_lea.vmem %s3, %s363
      $region44: #{encoder.3} parent=39 // pred_fallthru
        _
    $region40: #{encoder.3} parent=5 // pred_fallthru
      _
  $region6: #{encoder.3} parent=0 // loop_footer
    %s13 = sadd.s32 1, %s9
  $region7: #{encoder.3} parent=0 // loop_footer_branch
    %8 = sbr.rel target = $region3
  $region8: #{encoder.3} parent=0 // loop_exit
    _

// kernel: encoder.4
$region0: #{encoder.4}
  #allocation0 [shape = 'u32[]', space=smem, size = 0x4, offset = 0x4, fixed_abs, tag = 'smem constant byte address 0x4 - core index']
  #allocation1 [shape = 'u32[144,128]{1,0:T(1,128)}', space=vmem, size = 0x12000, scoped, tag = 'internal scratch']
  %s0 = inlined_call_operand.vmem [shape: f32[64,144], index: 0, kind: input, shape index: {}]
  %s1 = inlined_call_operand.vmem [shape: f32[64,1], index: 1, kind: input, shape index: {}]
  %s2 = inlined_call_operand.vmem [shape: f32[2,144,256], index: 2, kind: input, shape index: {}]
  %s3 = inlined_call_operand.vmem [shape: f32[2,32,256], index: 3, kind: output, shape index: {}]
  %s4 = sld [smem:[#allocation0]]
  $region45: #{encoder.4} parent=0
    _
  %s6 = ssub.s32 1, %s4
  %s7 = scalar_select 0, %s6, %s4
  loop: start=0, step=1, limit=4
  $region2: #{encoder.4} parent=0 // loop_pre_header
    _
  $region3: #{encoder.4} parent=0 // loop_header
    %s9 = sphi 0, %s13
    %p10 = scmp.ge.s32.totalorder %s9, 4
    %s17 = sphi 0, %s17
    %s19 = sphi 0, %s17
    %s20 = sphi 0, %s19
    %s34 = sphi 0, %s20
    %s38 = sphi 0, %s38
    %s40 = sphi 0, %s38
    %s41 = sphi 0, %s40
    %s55 = sphi 0, %s41
    %s61 = sphi 0, %s63
    %s64 = sphi 0, %s61
    %s65 = sphi 0, %s64
    %s81 = sphi 0, %s65
    %s87 = sphi 0, %s89
    %s90 = sphi 0, %s87
    %s91 = sphi 0, %s90
    %s107 = sphi 0, %s91
  $region4: #{encoder.4} parent=0 // loop_header_branch
    %12 = sbr.rel (%p10) target = $region8
  $region5: #{encoder.4} parent=0 // loop_body
    %s14 = ssub.s32 %s9, 1
    %s15 = ssub.s32 %s9, 2
    %s16 = sadd.s32 %s9, 1
    %s18 = sadd.s32 %s17, 1
    %p21 = scmp.eq.s32.totalorder %s9, 1
    %p22 = scmp.ne.s32.totalorder %s17, %s19
    %p23 = scmp.eq.s32.totalorder %s9, 0
    %p24 = por %p22, %p23
    %p25 = scmp.ne.s32.totalorder %s17, %s19
    %p26 = scmp.eq.s32.totalorder %s14, 1
    %p27 = por %p25, %p26
    %p28 = scmp.ne.s32.totalorder %s19, %s20
    %p29 = scmp.eq.s32.totalorder %s14, 0
    %p30 = por %p28, %p29
    %p31 = scmp.ne.s32.totalorder %s19, %s20
    %p32 = scmp.eq.s32.totalorder %s15, 1
    %p33 = por %p31, %p32
    %p35 = scmp.ne.s32.totalorder %s20, %s34
    %p36 = scmp.eq.s32.totalorder %s15, 0
    %p37 = por %p35, %p36
    %s39 = sadd.s32 %s38, 1
    %p42 = scmp.eq.s32.totalorder %s9, 1
    %p43 = scmp.ne.s32.totalorder %s38, %s40
    %p44 = scmp.eq.s32.totalorder %s9, 0
    %p45 = por %p43, %p44
    %p46 = scmp.ne.s32.totalorder %s38, %s40
    %p47 = scmp.eq.s32.totalorder %s14, 1
    %p48 = por %p46, %p47
    %p49 = scmp.ne.s32.totalorder %s40, %s41
    %p50 = scmp.eq.s32.totalorder %s14, 0
    %p51 = por %p49, %p50
    %p52 = scmp.ne.s32.totalorder %s40, %s41
    %p53 = scmp.eq.s32.totalorder %s15, 1
    %p54 = por %p52, %p53
    %p56 = scmp.ne.s32.totalorder %s41, %s55
    %p57 = scmp.eq.s32.totalorder %s15, 0
    %p58 = por %p56, %p57
    %s59 = ssub.s32 %s9, %s16
    %p60 = scmp.eq.s32.totalorder %s59, 0
    %s62 = sadd.s32 %s61, 1
    %s63 = scalar_select %p60, %s61, %s62
    %p66 = pneg %p60
    %p67 = scmp.eq.s32.totalorder %s9, 1
    %p68 = por %p66, %p67
    %p69 = scmp.ne.s32.totalorder %s61, %s64
    %p70 = scmp.eq.s32.totalorder %s9, 0
    %p71 = por %p69, %p70
    %p72 = scmp.ne.s32.totalorder %s61, %s64
    %p73 = scmp.eq.s32.totalorder %s14, 1
    %p74 = por %p72, %p73
    %p75 = scmp.ne.s32.totalorder %s64, %s65
    %p76 = scmp.eq.s32.totalorder %s14, 0
    %p77 = por %p75, %p76
    %p78 = scmp.ne.s32.totalorder %s64, %s65
    %p79 = scmp.eq.s32.totalorder %s15, 1
    %p80 = por %p78, %p79
    %p82 = scmp.ne.s32.totalorder %s65, %s81
    %p83 = scmp.eq.s32.totalorder %s15, 0
    %p84 = por %p82, %p83
    %s85 = ssub.s32 %s9, %s16
    %p86 = scmp.eq.s32.totalorder %s85, 0
    %s88 = sadd.s32 %s87, 1
    %s89 = scalar_select %p86, %s87, %s88
    %p92 = pneg %p86
    %p93 = scmp.eq.s32.totalorder %s9, 1
    %p94 = por %p92, %p93
    %p95 = scmp.ne.s32.totalorder %s87, %s90
    %p96 = scmp.eq.s32.totalorder %s9, 0
    %p97 = por %p95, %p96
    %p98 = scmp.ne.s32.totalorder %s87, %s90
    %p99 = scmp.eq.s32.totalorder %s14, 1
    %p100 = por %p98, %p99
    %p101 = scmp.ne.s32.totalorder %s90, %s91
    %p102 = scmp.eq.s32.totalorder %s14, 0
    %p103 = por %p101, %p102
    %p104 = scmp.ne.s32.totalorder %s90, %s91
    %p105 = scmp.eq.s32.totalorder %s15, 1
    %p106 = por %p104, %p105
    %p108 = scmp.ne.s32.totalorder %s91, %s107
    %p109 = scmp.eq.s32.totalorder %s15, 0
    %p110 = por %p108, %p109
    %p111 = scmp.le.s32.totalorder 1, %s9
    %p112 = scmp.lt.s32.totalorder %s9, 3
    %p113 = pnand %p111, %p112
    %p114 = pneg %p113
    // Predicated region
    $region9: #{encoder.4} parent=5 // pred_check
      _
    $region10: #{encoder.4} parent=5 // pred_check_branch
      %116 = sbr.rel (%p113) target = $region12
    $region11: #{encoder.4} parent=5 // pred_region
      %s117 = ssub.s32 %s9, 1
      // Predicated region
      $region13: #{encoder.4} parent=11 // pred_check
        %p118 = pneg %p30
      $region14: #{encoder.4} parent=11 // pred_check_branch
        %120 = sbr.rel (%p118) target = $region16
      $region15: #{encoder.4} parent=11 // pred_region
        _
      $region16: #{encoder.4} parent=11 // pred_fallthru
        _
      // Predicated region
      $region17: #{encoder.4} parent=11 // pred_check
        %p121 = pneg %p51
      $region18: #{encoder.4} parent=11 // pred_check_branch
        %123 = sbr.rel (%p121) target = $region20
      $region19: #{encoder.4} parent=11 // pred_region
        _
      $region20: #{encoder.4} parent=11 // pred_fallthru
        _
    $region12: #{encoder.4} parent=5 // pred_fallthru
      _
    %p124 = scmp.lt.s32.totalorder %s9, 2
    // Predicated region
    $region21: #{encoder.4} parent=5 // pred_check
      %p125 = pneg %p124
    $region22: #{encoder.4} parent=5 // pred_check_branch
      %127 = sbr.rel (%p125) target = $region24
    $region23: #{encoder.4} parent=5 // pred_region
      // Predicated region
      $region25: #{encoder.4} parent=23 // pred_check
        %p128 = pneg %p71
      $region26: #{encoder.4} parent=23 // pred_check_branch
        %130 = sbr.rel (%p128) target = $region28
      $region27: #{encoder.4} parent=23 // pred_region
        %p131 = scmp.lt.s32.totalorder %s9, 1
        %s132 = scalar_select %p131, %s9, 1
        %s133 = smul.addr %s132, 36
        %s134 = smul.addr %s133, 8
        %s135 = scalar_lea.vmem %s2, %s134
      $region28: #{encoder.4} parent=23 // pred_fallthru
        _
    $region24: #{encoder.4} parent=5 // pred_fallthru
      _
    %p136 = scmp.le.s32.totalorder 1, %s9
    %p137 = scmp.lt.s32.totalorder %s9, 3
    %p138 = pnand %p136, %p137
    %p139 = pneg %p138
    // Predicated region
    $region29: #{encoder.4} parent=5 // pred_check
      _
    $region30: #{encoder.4} parent=5 // pred_check_branch
      %141 = sbr.rel (%p138) target = $region32
    $region31: #{encoder.4} parent=5 // pred_region
      %s142 = ssub.s32 %s9, 1
      %p143 = pneg %p30
      %p144 = pneg %p27
      %p145 = pneg %p51
      %p146 = pneg %p48
      %p147 = scmp.lt.s32.totalorder %s14, 1
      %s148 = scalar_select %p147, %s14, 1
      %s149 = smul.addr %s148, 36
      %s150 = smul.addr %s149, 8
      %s151 = scalar_lea.vmem %s2, %s150
      %p152 = pneg %p77
      %p153 = pneg %p74
      %p154 = pneg %p103
      %p155 = pneg %p100
      %p156 = scmp.lt.s32.totalorder %s14, 1
      %s157 = scalar_select %p156, %s14, 1
      %s158 = smul.addr %s157, 8
      %s159 = smul.addr %s158, 8
      %s160 = scalar_lea.vmem %s3, %s159
      %p161 = scmp.lt.s32.totalorder %s14, 1
      %s162 = scalar_select %p161, %s14, 1
      %s163 = smul.addr %s162, 36
      %s164 = smul.addr %s163, 8
      %s165 = scalar_lea.vmem %s2, %s164
      %p166 = scmp.lt.s32.totalorder %s14, 1
      %s167 = scalar_select %p166, %s14, 1
      %s168 = smul.addr %s167, 8
      %s169 = smul.addr %s168, 8
      %s170 = scalar_lea.vmem %s3, %s169
      %v171 = vld [vmem:[%s165] sm:$0xff]
      %v172 = vld [vmem:[%s165 + $0x8] sm:$0xff]
      %v173 = vld [vmem:[%s165 + $0x10] sm:$0xff]
      %v174 = vld [vmem:[%s165 + $0x18] sm:$0xff]
      %v175 = vld [vmem:[%s165 + $0x20] sm:$0xff]
      %v176 = vld [vmem:[%s165 + $0x28] sm:$0xff]
      %v177 = vld [vmem:[%s165 + $0x30] sm:$0xff]
      %v178 = vld [vmem:[%s165 + $0x38] sm:$0xff]
      %v179 = vld [vmem:[%s165 + $0x40] sm:$0xff]
      %v180 = vld [vmem:[%s165 + $0x48] sm:$0xff]
      %v181 = vld [vmem:[%s165 + $0x50] sm:$0xff]
      %v182 = vld [vmem:[%s165 + $0x58] sm:$0xff]
      %v183 = vld [vmem:[%s165 + $0x60] sm:$0xff]
      %v184 = vld [vmem:[%s165 + $0x68] sm:$0xff]
      %v185 = vld [vmem:[%s165 + $0x70] sm:$0xff]
      %v186 = vld [vmem:[%s165 + $0x78] sm:$0xff]
      %v187 = vld [vmem:[%s165 + $0x80] sm:$0xff]
      %v188 = vld [vmem:[%s165 + $0x88] sm:$0xff]
      %v189 = vld [vmem:[%s165 + $0x90] sm:$0xff]
      %v190 = vld [vmem:[%s165 + $0x98] sm:$0xff]
      %v191 = vld [vmem:[%s165 + $0xa0] sm:$0xff]
      %v192 = vld [vmem:[%s165 + $0xa8] sm:$0xff]
      %v193 = vld [vmem:[%s165 + $0xb0] sm:$0xff]
      %v194 = vld [vmem:[%s165 + $0xb8] sm:$0xff]
      %v195 = vld [vmem:[%s165 + $0xc0] sm:$0xff]
      %v196 = vld [vmem:[%s165 + $0xc8] sm:$0xff]
      %v197 = vld [vmem:[%s165 + $0xd0] sm:$0xff]
      %v198 = vld [vmem:[%s165 + $0xd8] sm:$0xff]
      %v199 = vld [vmem:[%s165 + $0xe0] sm:$0xff]
      %v200 = vld [vmem:[%s165 + $0xe8] sm:$0xff]
      %v201 = vld [vmem:[%s165 + $0xf0] sm:$0xff]
      %v202 = vld [vmem:[%s165 + $0xf8] sm:$0xff]
      %v203 = vld [vmem:[%s165 + $0x100] sm:$0xff]
      %v204 = vld [vmem:[%s165 + $0x108] sm:$0xff]
      %v205 = vld [vmem:[%s165 + $0x110] sm:$0xff]
      %v206 = vld [vmem:[%s165 + $0x118] sm:$0xff]
      %v207 = vld [vmem:[%s0] sm:$0xff]
      %v208 = vld [vmem:[%s0 + $0x8] sm:$0xff]
      %v209 = vld [vmem:[%s0 + $0x10] sm:$0xff]
      %v210 = vld [vmem:[%s0 + $0x18] sm:$0xff]
      %v211 = vld [vmem:[%s0 + $0x20] sm:$0xff]
      %v212 = vld [vmem:[%s0 + $0x28] sm:$0xff]
      %v213 = vld [vmem:[%s0 + $0x30] sm:$0xff]
      %v214 = vld [vmem:[%s0 + $0x38] sm:$0xff]
      %v215 = vld [vmem:[%s0 + $0x40] sm:$0xff]
      %v216 = vld [vmem:[%s0 + $0x48] sm:$0xff]
      %v217 = vld [vmem:[%s0 + $0x50] sm:$0xff]
      %v218 = vld [vmem:[%s0 + $0x58] sm:$0xff]
      %v219 = vld [vmem:[%s0 + $0x60] sm:$0xff]
      %v220 = vld [vmem:[%s0 + $0x68] sm:$0xff]
      %v221 = vld [vmem:[%s0 + $0x70] sm:$0xff]
      %v222 = vld [vmem:[%s0 + $0x78] sm:$0xff]
      %v223 = vld [vmem:[%s1] sm:$0xff]
      %v224 = vld [vmem:[%s1 + $0x8] sm:$0xff]
      %v225 = vld [vmem:[%s1 + $0x10] sm:$0xff]
      %v226 = vld [vmem:[%s1 + $0x18] sm:$0xff]
      %v227 = vld [vmem:[%s1 + $0x20] sm:$0xff]
      %v228 = vld [vmem:[%s1 + $0x28] sm:$0xff]
      %v229 = vld [vmem:[%s1 + $0x30] sm:$0xff]
      %v230 = vld [vmem:[%s1 + $0x38] sm:$0xff]
      %232 = vset.pattern.permute.xlu0 0
      %233 = vperm.xlu0 %232, %v223
      %v234 = vpop.permute.xlu0 %233
      %237 = vset.pattern.permute.xlu0 0
      %238 = vperm.xlu0 %237, %v224
      %v239 = vpop.permute.xlu0 %238
      %242 = vset.pattern.permute.xlu0 0
      %243 = vperm.xlu0 %242, %v225
      %v244 = vpop.permute.xlu0 %243
      %247 = vset.pattern.permute.xlu0 0
      %248 = vperm.xlu0 %247, %v226
      %v249 = vpop.permute.xlu0 %248
      %252 = vset.pattern.permute.xlu0 0
      %253 = vperm.xlu0 %252, %v227
      %v254 = vpop.permute.xlu0 %253
      %257 = vset.pattern.permute.xlu0 0
      %258 = vperm.xlu0 %257, %v228
      %v259 = vpop.permute.xlu0 %258
      %262 = vset.pattern.permute.xlu0 0
      %263 = vperm.xlu0 %262, %v229
      %v264 = vpop.permute.xlu0 %263
      %267 = vset.pattern.permute.xlu0 0
      %268 = vperm.xlu0 %267, %v230
      %v269 = vpop.permute.xlu0 %268
      %vm271 = vcmask 130048
      %v273 = vsel %vm271, %v208, 0
      %v276 = vsel %vm271, %v210, 0
      %v279 = vsel %vm271, %v212, 0
      %v282 = vsel %vm271, %v214, 0
      %v285 = vsel %vm271, %v216, 0
      %v288 = vsel %vm271, %v218, 0
      %v291 = vsel %vm271, %v220, 0
      %v294 = vsel %vm271, %v222, 0
      %296 = vmatprep.subr.mxu0 %v202
      %297 = vmatpush1.msra.mxu0 %v201
      %298 = vmatprep.subr.mxu0 %v200
      %299 = vmatpush1.msra.mxu0 %v199
      %300 = vmatprep.subr.mxu0 %v198
      %301 = vmatpush1.msra.mxu0 %v197
      %302 = vmatprep.subr.mxu0 %v196
      %303 = vmatpush1.msra.mxu0 %v195
      %304 = vmatprep.subr.mxu0 %v194
      %305 = vmatpush1.msra.mxu0 %v193
      %306 = vmatprep.subr.mxu0 %v192
      %307 = vmatpush1.msra.mxu0 %v191
      %308 = vmatprep.subr.mxu0 %v190
      %309 = vmatpush1.msra.mxu0 %v189
      %310 = vmatprep.subr.mxu0 %v188
      %311 = vmatpush1.msra.mxu0 %v187
      %312 = vmatprep.subr.mxu0 %v186
      %313 = vmatpush1.msra.mxu0 %v185
      %314 = vmatprep.subr.mxu0 %v184
      %315 = vmatpush1.msra.mxu0 %v183
      %316 = vmatprep.subr.mxu0 %v182
      %317 = vmatpush1.msra.mxu0 %v181
      %318 = vmatprep.subr.mxu0 %v180
      %319 = vmatpush1.msra.mxu0 %v179
      %320 = vmatprep.subr.mxu0 %v178
      %321 = vmatpush1.msra.mxu0 %v177
      %322 = vmatprep.subr.mxu0 %v176
      %323 = vmatpush1.msra.mxu0 %v175
      %324 = vmatprep.subr.mxu0 %v174
      %325 = vmatpush1.msra.mxu0 %v173
      %326 = vmatprep.subr.mxu0 %v172
      %327 = vmatpush1.msra.mxu0 %v171
      %328 = vmatprep.subr.mxu0 0.0
      %329 = vmatpush2.msra.mxu0 0.0
      %330 = vmatprep.subr.mxu0 0.0
      %331 = vmatpush2.msra.mxu0 0.0
      %332 = vmatprep.subr.mxu0 0.0
      %333 = vmatpush2.msra.mxu0 0.0
      %334 = vmatprep.subr.mxu0 0.0
      %335 = vmatpush2.msra.mxu0 0.0
      %336 = vmatprep.subr.mxu0 0.0
      %337 = vmatpush2.msra.mxu0 0.0
      %338 = vmatprep.subr.mxu0 0.0
      %339 = vmatpush2.msra.mxu0 0.0
      %340 = vmatprep.subr.mxu0 0.0
      %341 = vmatpush2.msra.mxu0 0.0
      %342 = vmatprep.subr.mxu0 0.0
      %343 = vmatpush2.msra.mxu0 0.0
      %344 = vmatprep.subr.mxu0 0.0
      %345 = vmatpush2.msra.mxu0 0.0
      %346 = vmatprep.subr.mxu0 0.0
      %347 = vmatpush2.msra.mxu0 0.0
      %348 = vmatprep.subr.mxu0 0.0
      %349 = vmatpush2.msra.mxu0 0.0
      %350 = vmatprep.subr.mxu0 0.0
      %351 = vmatpush2.msra.mxu0 0.0
      %352 = vmatprep.subr.mxu0 0.0
      %353 = vmatpush2.msra.mxu0 0.0
      %354 = vmatprep.subr.mxu0 0.0
      %355 = vmatpush2.msra.mxu0 0.0
      %356 = vmatprep.subr.mxu0 %v206
      %357 = vmatpush2.msra.mxu0 %v205
      %358 = vmatprep.subr.mxu0 %v204
      %359 = vmatpush2.msra.mxu0 %v203
      %360 = vmatprep.mubr.f32.mxu0 %v273
      %361 = vmatmul.mubr.f32.gmra.mxu0 %v207
      %v362 = vpop.f32.mrf.mxu0
      %v363 = vadd.f32 %v234, %v362
      %v364 = vpop.f32.mrf.mxu0
      %v365 = vadd.f32 %v234, %v364
      %366 = vmatprep.mubr.f32.mxu0 %v276
      %367 = vmatmul.mubr.f32.gmra.mxu0 %v209
      %v368 = vpop.f32.mrf.mxu0
      %v369 = vadd.f32 %v239, %v368
      %v370 = vpop.f32.mrf.mxu0
      %v371 = vadd.f32 %v239, %v370
      %372 = vmatprep.mubr.f32.mxu0 %v279
      %373 = vmatmul.mubr.f32.gmra.mxu0 %v211
      %v374 = vpop.f32.mrf.mxu0
      %v375 = vadd.f32 %v244, %v374
      %v376 = vpop.f32.mrf.mxu0
      %v377 = vadd.f32 %v244, %v376
      %378 = vmatprep.mubr.f32.mxu0 %v282
      %379 = vmatmul.mubr.f32.gmra.mxu0 %v213
      %v380 = vpop.f32.mrf.mxu0
      %v381 = vadd.f32 %v249, %v380
      %v382 = vpop.f32.mrf.mxu0
      %v383 = vadd.f32 %v249, %v382
      %384 = vmatprep.mubr.f32.mxu0 %v285
      %385 = vmatmul.mubr.f32.gmra.mxu0 %v215
      %v386 = vpop.f32.mrf.mxu0
      %v387 = vadd.f32 %v254, %v386
      %v388 = vpop.f32.mrf.mxu0
      %v389 = vadd.f32 %v254, %v388
      %390 = vmatprep.mubr.f32.mxu0 %v288
      %391 = vmatmul.mubr.f32.gmra.mxu0 %v217
      %v392 = vpop.f32.mrf.mxu0
      %v393 = vadd.f32 %v259, %v392
      %v394 = vpop.f32.mrf.mxu0
      %v395 = vadd.f32 %v259, %v394
      %396 = vmatprep.mubr.f32.mxu0 %v291
      %397 = vmatmul.mubr.f32.gmra.mxu0 %v219
      %v398 = vpop.f32.mrf.mxu0
      %v399 = vadd.f32 %v264, %v398
      %v400 = vpop.f32.mrf.mxu0
      %v401 = vadd.f32 %v264, %v400
      %402 = vmatprep.mubr.f32.mxu0 %v294
      %403 = vmatmul.mubr.f32.gmra.mxu0 %v221
      %v404 = vpop.f32.mrf.mxu0
      %v405 = vadd.f32 %v269, %v404
      %v406 = vpop.f32.mrf.mxu0
      %v407 = vadd.f32 %v269, %v406
      %408 = vdwg.mxu0
      %v409 = vxor.u32 %v387, 2147483648
      %v410 = vxor.u32 %v389, 2147483648
      %v411 = vxor.u32 %v393, 2147483648
      %v412 = vxor.u32 %v395, 2147483648
      %v413 = vxor.u32 %v399, 2147483648
      %v414 = vxor.u32 %v401, 2147483648
      %v415 = vxor.u32 %v405, 2147483648
      %v416 = vxor.u32 %v407, 2147483648
      %v417 = vmul.f32 %v409, 1.442695
      %v418 = vpow.pop %v417
      %v419 = vmul.f32 %v410, 1.442695
      %v420 = vpow.pop %v419
      %v421 = vmul.f32 %v411, 1.442695
      %v422 = vpow.pop %v421
      %v423 = vmul.f32 %v412, 1.442695
      %v424 = vpow.pop %v423
      %v425 = vmul.f32 %v413, 1.442695
      %v426 = vpow.pop %v425
      %v427 = vmul.f32 %v414, 1.442695
      %v428 = vpow.pop %v427
      %v429 = vmul.f32 %v415, 1.442695
      %v430 = vpow.pop %v429
      %v431 = vmul.f32 %v416, 1.442695
      %v432 = vpow.pop %v431
      %v433 = vadd.f32 %v418, 1.0
      %v434 = vadd.f32 %v420, 1.0
      %v435 = vadd.f32 %v422, 1.0
      %v436 = vadd.f32 %v424, 1.0
      %v437 = vadd.f32 %v426, 1.0
      %v438 = vadd.f32 %v428, 1.0
      %v439 = vadd.f32 %v430, 1.0
      %v440 = vadd.f32 %v432, 1.0
      %v441 = vrcp.pop %v433
      %v442 = vmul.f32 1.0, %v441
      %v443 = vrcp.pop %v434
      %v444 = vmul.f32 1.0, %v443
      %v445 = vrcp.pop %v435
      %v446 = vmul.f32 1.0, %v445
      %v447 = vrcp.pop %v436
      %v448 = vmul.f32 1.0, %v447
      %v449 = vrcp.pop %v437
      %v450 = vmul.f32 1.0, %v449
      %v451 = vrcp.pop %v438
      %v452 = vmul.f32 1.0, %v451
      %v453 = vrcp.pop %v439
      %v454 = vmul.f32 1.0, %v453
      %v455 = vrcp.pop %v440
      %v456 = vmul.f32 1.0, %v455
      %v457 = vmul.f32 %v363, %v442
      %v458 = vmul.f32 %v365, %v444
      %v459 = vmul.f32 %v369, %v446
      %v460 = vmul.f32 %v371, %v448
      %v461 = vmul.f32 %v375, %v450
      %v462 = vmul.f32 %v377, %v452
      %v463 = vmul.f32 %v381, %v454
      %v464 = vmul.f32 %v383, %v456
      %465 = vst [vmem:[%s170] sm:$0xff] %v457
      %466 = vst [vmem:[%s170 + $0x8] sm:$0xff] %v458
      %467 = vst [vmem:[%s170 + $0x10] sm:$0xff] %v459
      %468 = vst [vmem:[%s170 + $0x18] sm:$0xff] %v460
      %469 = vst [vmem:[%s170 + $0x20] sm:$0xff] %v461
      %470 = vst [vmem:[%s170 + $0x28] sm:$0xff] %v462
      %471 = vst [vmem:[%s170 + $0x30] sm:$0xff] %v463
      %472 = vst [vmem:[%s170 + $0x38] sm:$0xff] %v464
      %p473 = scmp.lt.s32.totalorder %s14, 1
      %s474 = scalar_select %p473, %s14, 1
      %s475 = smul.addr %s474, 8
      %s476 = smul.addr %s475, 8
      %s477 = scalar_lea.vmem %s3, %s476
      // Predicated region
      $region33: #{encoder.4} parent=31 // pred_check
        %p478 = pneg %p100
      $region34: #{encoder.4} parent=31 // pred_check_branch
        %480 = sbr.rel (%p478) target = $region36
      $region35: #{encoder.4} parent=31 // pred_region
        _
      $region36: #{encoder.4} parent=31 // pred_fallthru
        _
    $region32: #{encoder.4} parent=5 // pred_fallthru
      _
    %p481 = scmp.le.s32.totalorder 2, %s9
    // Predicated region
    $region37: #{encoder.4} parent=5 // pred_check
      %p482 = pneg %p481
    $region38: #{encoder.4} parent=5 // pred_check_branch
      %484 = sbr.rel (%p482) target = $region40
    $region39: #{encoder.4} parent=5 // pred_region
      %s485 = ssub.s32 %s9, 2
      // Predicated region
      $region41: #{encoder.4} parent=39 // pred_check
        %p486 = pneg %p106
      $region42: #{encoder.4} parent=39 // pred_check_branch
        %488 = sbr.rel (%p486) target = $region44
      $region43: #{encoder.4} parent=39 // pred_region
        %p489 = scmp.lt.s32.totalorder %s15, 1
        %s490 = scalar_select %p489, %s15, 1
        %s491 = smul.addr %s490, 8
        %s492 = smul.addr %s491, 8
        %s493 = scalar_lea.vmem %s3, %s492
      $region44: #{encoder.4} parent=39 // pred_fallthru
        _
    $region40: #{encoder.4} parent=5 // pred_fallthru
      _
  $region6: #{encoder.4} parent=0 // loop_footer
    %s13 = sadd.s32 1, %s9
  $region7: #{encoder.4} parent=0 // loop_footer_branch
    %8 = sbr.rel target = $region3
  $region8: #{encoder.4} parent=0 // loop_exit
    _

// kernel: encoder.5
$region0: #{encoder.5}
  #allocation0 [shape = 'u32[]', space=smem, size = 0x4, offset = 0x4, fixed_abs, tag = 'smem constant byte address 0x4 - core index']
  #allocation1 [shape = 'u32[144,128]{1,0:T(1,128)}', space=vmem, size = 0x12000, scoped, tag = 'internal scratch']
  %s0 = inlined_call_operand.vmem [shape: f32[128,288], index: 0, kind: input, shape index: {}]
  %s1 = inlined_call_operand.vmem [shape: f32[128,1], index: 1, kind: input, shape index: {}]
  %s2 = inlined_call_operand.vmem [shape: f32[2,288,256], index: 2, kind: input, shape index: {}]
  %s3 = inlined_call_operand.vmem [shape: f32[2,64,256], index: 3, kind: output, shape index: {}]
  %s4 = sld [smem:[#allocation0]]
  $region45: #{encoder.5} parent=0
    _
  %s6 = ssub.s32 1, %s4
  %s7 = scalar_select 0, %s6, %s4
  loop: start=0, step=1, limit=4
  $region2: #{encoder.5} parent=0 // loop_pre_header
    _
  $region3: #{encoder.5} parent=0 // loop_header
    %s9 = sphi 0, %s13
    %p10 = scmp.ge.s32.totalorder %s9, 4
    %s17 = sphi 0, %s17
    %s19 = sphi 0, %s17
    %s20 = sphi 0, %s19
    %s34 = sphi 0, %s20
    %s38 = sphi 0, %s38
    %s40 = sphi 0, %s38
    %s41 = sphi 0, %s40
    %s55 = sphi 0, %s41
    %s61 = sphi 0, %s63
    %s64 = sphi 0, %s61
    %s65 = sphi 0, %s64
    %s81 = sphi 0, %s65
    %s87 = sphi 0, %s89
    %s90 = sphi 0, %s87
    %s91 = sphi 0, %s90
    %s107 = sphi 0, %s91
  $region4: #{encoder.5} parent=0 // loop_header_branch
    %12 = sbr.rel (%p10) target = $region8
  $region5: #{encoder.5} parent=0 // loop_body
    %s14 = ssub.s32 %s9, 1
    %s15 = ssub.s32 %s9, 2
    %s16 = sadd.s32 %s9, 1
    %s18 = sadd.s32 %s17, 1
    %p21 = scmp.eq.s32.totalorder %s9, 1
    %p22 = scmp.ne.s32.totalorder %s17, %s19
    %p23 = scmp.eq.s32.totalorder %s9, 0
    %p24 = por %p22, %p23
    %p25 = scmp.ne.s32.totalorder %s17, %s19
    %p26 = scmp.eq.s32.totalorder %s14, 1
    %p27 = por %p25, %p26
    %p28 = scmp.ne.s32.totalorder %s19, %s20
    %p29 = scmp.eq.s32.totalorder %s14, 0
    %p30 = por %p28, %p29
    %p31 = scmp.ne.s32.totalorder %s19, %s20
    %p32 = scmp.eq.s32.totalorder %s15, 1
    %p33 = por %p31, %p32
    %p35 = scmp.ne.s32.totalorder %s20, %s34
    %p36 = scmp.eq.s32.totalorder %s15, 0
    %p37 = por %p35, %p36
    %s39 = sadd.s32 %s38, 1
    %p42 = scmp.eq.s32.totalorder %s9, 1
    %p43 = scmp.ne.s32.totalorder %s38, %s40
    %p44 = scmp.eq.s32.totalorder %s9, 0
    %p45 = por %p43, %p44
    %p46 = scmp.ne.s32.totalorder %s38, %s40
    %p47 = scmp.eq.s32.totalorder %s14, 1
    %p48 = por %p46, %p47
    %p49 = scmp.ne.s32.totalorder %s40, %s41
    %p50 = scmp.eq.s32.totalorder %s14, 0
    %p51 = por %p49, %p50
    %p52 = scmp.ne.s32.totalorder %s40, %s41
    %p53 = scmp.eq.s32.totalorder %s15, 1
    %p54 = por %p52, %p53
    %p56 = scmp.ne.s32.totalorder %s41, %s55
    %p57 = scmp.eq.s32.totalorder %s15, 0
    %p58 = por %p56, %p57
    %s59 = ssub.s32 %s9, %s16
    %p60 = scmp.eq.s32.totalorder %s59, 0
    %s62 = sadd.s32 %s61, 1
    %s63 = scalar_select %p60, %s61, %s62
    %p66 = pneg %p60
    %p67 = scmp.eq.s32.totalorder %s9, 1
    %p68 = por %p66, %p67
    %p69 = scmp.ne.s32.totalorder %s61, %s64
    %p70 = scmp.eq.s32.totalorder %s9, 0
    %p71 = por %p69, %p70
    %p72 = scmp.ne.s32.totalorder %s61, %s64
    %p73 = scmp.eq.s32.totalorder %s14, 1
    %p74 = por %p72, %p73
    %p75 = scmp.ne.s32.totalorder %s64, %s65
    %p76 = scmp.eq.s32.totalorder %s14, 0
    %p77 = por %p75, %p76
    %p78 = scmp.ne.s32.totalorder %s64, %s65
    %p79 = scmp.eq.s32.totalorder %s15, 1
    %p80 = por %p78, %p79
    %p82 = scmp.ne.s32.totalorder %s65, %s81
    %p83 = scmp.eq.s32.totalorder %s15, 0
    %p84 = por %p82, %p83
    %s85 = ssub.s32 %s9, %s16
    %p86 = scmp.eq.s32.totalorder %s85, 0
    %s88 = sadd.s32 %s87, 1
    %s89 = scalar_select %p86, %s87, %s88
    %p92 = pneg %p86
    %p93 = scmp.eq.s32.totalorder %s9, 1
    %p94 = por %p92, %p93
    %p95 = scmp.ne.s32.totalorder %s87, %s90
    %p96 = scmp.eq.s32.totalorder %s9, 0
    %p97 = por %p95, %p96
    %p98 = scmp.ne.s32.totalorder %s87, %s90
    %p99 = scmp.eq.s32.totalorder %s14, 1
    %p100 = por %p98, %p99
    %p101 = scmp.ne.s32.totalorder %s90, %s91
    %p102 = scmp.eq.s32.totalorder %s14, 0
    %p103 = por %p101, %p102
    %p104 = scmp.ne.s32.totalorder %s90, %s91
    %p105 = scmp.eq.s32.totalorder %s15, 1
    %p106 = por %p104, %p105
    %p108 = scmp.ne.s32.totalorder %s91, %s107
    %p109 = scmp.eq.s32.totalorder %s15, 0
    %p110 = por %p108, %p109
    %p111 = scmp.le.s32.totalorder 1, %s9
    %p112 = scmp.lt.s32.totalorder %s9, 3
    %p113 = pnand %p111, %p112
    %p114 = pneg %p113
    // Predicated region
    $region9: #{encoder.5} parent=5 // pred_check
      _
    $region10: #{encoder.5} parent=5 // pred_check_branch
      %116 = sbr.rel (%p113) target = $region12
    $region11: #{encoder.5} parent=5 // pred_region
      %s117 = ssub.s32 %s9, 1
      // Predicated region
      $region13: #{encoder.5} parent=11 // pred_check
        %p118 = pneg %p30
      $region14: #{encoder.5} parent=11 // pred_check_branch
        %120 = sbr.rel (%p118) target = $region16
      $region15: #{encoder.5} parent=11 // pred_region
        _
      $region16: #{encoder.5} parent=11 // pred_fallthru
        _
      // Predicated region
      $region17: #{encoder.5} parent=11 // pred_check
        %p121 = pneg %p51
      $region18: #{encoder.5} parent=11 // pred_check_branch
        %123 = sbr.rel (%p121) target = $region20
      $region19: #{encoder.5} parent=11 // pred_region
        _
      $region20: #{encoder.5} parent=11 // pred_fallthru
        _
    $region12: #{encoder.5} parent=5 // pred_fallthru
      _
    %p124 = scmp.lt.s32.totalorder %s9, 2
    // Predicated region
    $region21: #{encoder.5} parent=5 // pred_check
      %p125 = pneg %p124
    $region22: #{encoder.5} parent=5 // pred_check_branch
      %127 = sbr.rel (%p125) target = $region24
    $region23: #{encoder.5} parent=5 // pred_region
      // Predicated region
      $region25: #{encoder.5} parent=23 // pred_check
        %p128 = pneg %p71
      $region26: #{encoder.5} parent=23 // pred_check_branch
        %130 = sbr.rel (%p128) target = $region28
      $region27: #{encoder.5} parent=23 // pred_region
        %p131 = scmp.lt.s32.totalorder %s9, 1
        %s132 = scalar_select %p131, %s9, 1
        %s133 = smul.addr %s132, 72
        %s134 = smul.addr %s133, 8
        %s135 = scalar_lea.vmem %s2, %s134
      $region28: #{encoder.5} parent=23 // pred_fallthru
        _
    $region24: #{encoder.5} parent=5 // pred_fallthru
      _
    %p136 = scmp.le.s32.totalorder 1, %s9
    %p137 = scmp.lt.s32.totalorder %s9, 3
    %p138 = pnand %p136, %p137
    %p139 = pneg %p138
    // Predicated region
    $region29: #{encoder.5} parent=5 // pred_check
      _
    $region30: #{encoder.5} parent=5 // pred_check_branch
      %141 = sbr.rel (%p138) target = $region32
    $region31: #{encoder.5} parent=5 // pred_region
      %s142 = ssub.s32 %s9, 1
      %p143 = pneg %p30
      %p144 = pneg %p27
      %p145 = pneg %p51
      %p146 = pneg %p48
      %p147 = scmp.lt.s32.totalorder %s14, 1
      %s148 = scalar_select %p147, %s14, 1
      %s149 = smul.addr %s148, 72
      %s150 = smul.addr %s149, 8
      %s151 = scalar_lea.vmem %s2, %s150
      %p152 = pneg %p77
      %p153 = pneg %p74
      %p154 = pneg %p103
      %p155 = pneg %p100
      %p156 = scmp.lt.s32.totalorder %s14, 1
      %s157 = scalar_select %p156, %s14, 1
      %s158 = smul.addr %s157, 16
      %s159 = smul.addr %s158, 8
      %s160 = scalar_lea.vmem %s3, %s159
      %p161 = scmp.lt.s32.totalorder %s14, 1
      %s162 = scalar_select %p161, %s14, 1
      %s163 = smul.addr %s162, 72
      %s164 = smul.addr %s163, 8
      %s165 = scalar_lea.vmem %s2, %s164
      %p166 = scmp.lt.s32.totalorder %s14, 1
      %s167 = scalar_select %p166, %s14, 1
      %s168 = smul.addr %s167, 16
      %s169 = smul.addr %s168, 8
      %s170 = scalar_lea.vmem %s3, %s169
      %v171 = vld [vmem:[%s165] sm:$0xff]
      %v172 = vld [vmem:[%s165 + $0x8] sm:$0xff]
      %v173 = vld [vmem:[%s165 + $0x10] sm:$0xff]
      %v174 = vld [vmem:[%s165 + $0x18] sm:$0xff]
      %v175 = vld [vmem:[%s165 + $0x20] sm:$0xff]
      %v176 = vld [vmem:[%s165 + $0x28] sm:$0xff]
      %v177 = vld [vmem:[%s165 + $0x30] sm:$0xff]
      %v178 = vld [vmem:[%s165 + $0x38] sm:$0xff]
      %v179 = vld [vmem:[%s165 + $0x40] sm:$0xff]
      %v180 = vld [vmem:[%s165 + $0x48] sm:$0xff]
      %v181 = vld [vmem:[%s165 + $0x50] sm:$0xff]
      %v182 = vld [vmem:[%s165 + $0x58] sm:$0xff]
      %v183 = vld [vmem:[%s165 + $0x60] sm:$0xff]
      %v184 = vld [vmem:[%s165 + $0x68] sm:$0xff]
      %v185 = vld [vmem:[%s165 + $0x70] sm:$0xff]
      %v186 = vld [vmem:[%s165 + $0x78] sm:$0xff]
      %v187 = vld [vmem:[%s165 + $0x80] sm:$0xff]
      %v188 = vld [vmem:[%s165 + $0x88] sm:$0xff]
      %v189 = vld [vmem:[%s165 + $0x90] sm:$0xff]
      %v190 = vld [vmem:[%s165 + $0x98] sm:$0xff]
      %v191 = vld [vmem:[%s165 + $0xa0] sm:$0xff]
      %v192 = vld [vmem:[%s165 + $0xa8] sm:$0xff]
      %v193 = vld [vmem:[%s165 + $0xb0] sm:$0xff]
      %v194 = vld [vmem:[%s165 + $0xb8] sm:$0xff]
      %v195 = vld [vmem:[%s165 + $0xc0] sm:$0xff]
      %v196 = vld [vmem:[%s165 + $0xc8] sm:$0xff]
      %v197 = vld [vmem:[%s165 + $0xd0] sm:$0xff]
      %v198 = vld [vmem:[%s165 + $0xd8] sm:$0xff]
      %v199 = vld [vmem:[%s165 + $0xe0] sm:$0xff]
      %v200 = vld [vmem:[%s165 + $0xe8] sm:$0xff]
      %v201 = vld [vmem:[%s165 + $0xf0] sm:$0xff]
      %v202 = vld [vmem:[%s165 + $0xf8] sm:$0xff]
      %v203 = vld [vmem:[%s165 + $0x100] sm:$0xff]
      %v204 = vld [vmem:[%s165 + $0x108] sm:$0xff]
      %v205 = vld [vmem:[%s165 + $0x110] sm:$0xff]
      %v206 = vld [vmem:[%s165 + $0x118] sm:$0xff]
      %v207 = vld [vmem:[%s165 + $0x120] sm:$0xff]
      %v208 = vld [vmem:[%s165 + $0x128] sm:$0xff]
      %v209 = vld [vmem:[%s165 + $0x130] sm:$0xff]
      %v210 = vld [vmem:[%s165 + $0x138] sm:$0xff]
      %v211 = vld [vmem:[%s165 + $0x140] sm:$0xff]
      %v212 = vld [vmem:[%s165 + $0x148] sm:$0xff]
      %v213 = vld [vmem:[%s165 + $0x150] sm:$0xff]
      %v214 = vld [vmem:[%s165 + $0x158] sm:$0xff]
      %v215 = vld [vmem:[%s165 + $0x160] sm:$0xff]
      %v216 = vld [vmem:[%s165 + $0x168] sm:$0xff]
      %v217 = vld [vmem:[%s165 + $0x170] sm:$0xff]
      %v218 = vld [vmem:[%s165 + $0x178] sm:$0xff]
      %v219 = vld [vmem:[%s165 + $0x180] sm:$0xff]
      %v220 = vld [vmem:[%s165 + $0x188] sm:$0xff]
      %v221 = vld [vmem:[%s165 + $0x190] sm:$0xff]
      %v222 = vld [vmem:[%s165 + $0x198] sm:$0xff]
      %v223 = vld [vmem:[%s165 + $0x1a0] sm:$0xff]
      %v224 = vld [vmem:[%s165 + $0x1a8] sm:$0xff]
      %v225 = vld [vmem:[%s165 + $0x1b0] sm:$0xff]
      %v226 = vld [vmem:[%s165 + $0x1b8] sm:$0xff]
      %v227 = vld [vmem:[%s165 + $0x1c0] sm:$0xff]
      %v228 = vld [vmem:[%s165 + $0x1c8] sm:$0xff]
      %v229 = vld [vmem:[%s165 + $0x1d0] sm:$0xff]
      %v230 = vld [vmem:[%s165 + $0x1d8] sm:$0xff]
      %v231 = vld [vmem:[%s165 + $0x1e0] sm:$0xff]
      %v232 = vld [vmem:[%s165 + $0x1e8] sm:$0xff]
      %v233 = vld [vmem:[%s165 + $0x1f0] sm:$0xff]
      %v234 = vld [vmem:[%s165 + $0x1f8] sm:$0xff]
      %v235 = vld [vmem:[%s165 + $0x200] sm:$0xff]
      %v236 = vld [vmem:[%s165 + $0x208] sm:$0xff]
      %v237 = vld [vmem:[%s165 + $0x210] sm:$0xff]
      %v238 = vld [vmem:[%s165 + $0x218] sm:$0xff]
      %v239 = vld [vmem:[%s165 + $0x220] sm:$0xff]
      %v240 = vld [vmem:[%s165 + $0x228] sm:$0xff]
      %v241 = vld [vmem:[%s165 + $0x230] sm:$0xff]
      %v242 = vld [vmem:[%s165 + $0x238] sm:$0xff]
      %v243 = vld [vmem:[%s0] sm:$0xff]
      %v244 = vld [vmem:[%s0 + $0x8] sm:$0xff]
      %v245 = vld [vmem:[%s0 + $0x10] sm:$0xff]
      %v246 = vld [vmem:[%s0 + $0x18] sm:$0xff]
      %v247 = vld [vmem:[%s0 + $0x20] sm:$0xff]
      %v248 = vld [vmem:[%s0 + $0x28] sm:$0xff]
      %v249 = vld [vmem:[%s0 + $0x30] sm:$0xff]
      %v250 = vld [vmem:[%s0 + $0x38] sm:$0xff]
      %v251 = vld [vmem:[%s0 + $0x40] sm:$0xff]
      %v252 = vld [vmem:[%s0 + $0x48] sm:$0xff]
      %v253 = vld [vmem:[%s0 + $0x50] sm:$0xff]
      %v254 = vld [vmem:[%s0 + $0x58] sm:$0xff]
      %v255 = vld [vmem:[%s0 + $0x60] sm:$0xff]
      %v256 = vld [vmem:[%s0 + $0x68] sm:$0xff]
      %v257 = vld [vmem:[%s0 + $0x70] sm:$0xff]
      %v258 = vld [vmem:[%s0 + $0x78] sm:$0xff]
      %v259 = vld [vmem:[%s0 + $0x80] sm:$0xff]
      %v260 = vld [vmem:[%s0 + $0x88] sm:$0xff]
      %v261 = vld [vmem:[%s0 + $0x90] sm:$0xff]
      %v262 = vld [vmem:[%s0 + $0x98] sm:$0xff]
      %v263 = vld [vmem:[%s0 + $0xa0] sm:$0xff]
      %v264 = vld [vmem:[%s0 + $0xa8] sm:$0xff]
      %v265 = vld [vmem:[%s0 + $0xb0] sm:$0xff]
      %v266 = vld [vmem:[%s0 + $0xb8] sm:$0xff]
      %v267 = vld [vmem:[%s0 + $0xc0] sm:$0xff]
      %v268 = vld [vmem:[%s0 + $0xc8] sm:$0xff]
      %v269 = vld [vmem:[%s0 + $0xd0] sm:$0xff]
      %v270 = vld [vmem:[%s0 + $0xd8] sm:$0xff]
      %v271 = vld [vmem:[%s0 + $0xe0] sm:$0xff]
      %v272 = vld [vmem:[%s0 + $0xe8] sm:$0xff]
      %v273 = vld [vmem:[%s0 + $0xf0] sm:$0xff]
      %v274 = vld [vmem:[%s0 + $0xf8] sm:$0xff]
      %v275 = vld [vmem:[%s0 + $0x100] sm:$0xff]
      %v276 = vld [vmem:[%s0 + $0x108] sm:$0xff]
      %v277 = vld [vmem:[%s0 + $0x110] sm:$0xff]
      %v278 = vld [vmem:[%s0 + $0x118] sm:$0xff]
      %v279 = vld [vmem:[%s0 + $0x120] sm:$0xff]
      %v280 = vld [vmem:[%s0 + $0x128] sm:$0xff]
      %v281 = vld [vmem:[%s0 + $0x130] sm:$0xff]
      %v282 = vld [vmem:[%s0 + $0x138] sm:$0xff]
      %v283 = vld [vmem:[%s0 + $0x140] sm:$0xff]
      %v284 = vld [vmem:[%s0 + $0x148] sm:$0xff]
      %v285 = vld [vmem:[%s0 + $0x150] sm:$0xff]
      %v286 = vld [vmem:[%s0 + $0x158] sm:$0xff]
      %v287 = vld [vmem:[%s0 + $0x160] sm:$0xff]
      %v288 = vld [vmem:[%s0 + $0x168] sm:$0xff]
      %v289 = vld [vmem:[%s0 + $0x170] sm:$0xff]
      %v290 = vld [vmem:[%s0 + $0x178] sm:$0xff]
      %v291 = vld [vmem:[%s1] sm:$0xff]
      %v292 = vld [vmem:[%s1 + $0x8] sm:$0xff]
      %v293 = vld [vmem:[%s1 + $0x10] sm:$0xff]
      %v294 = vld [vmem:[%s1 + $0x18] sm:$0xff]
      %v295 = vld [vmem:[%s1 + $0x20] sm:$0xff]
      %v296 = vld [vmem:[%s1 + $0x28] sm:$0xff]
      %v297 = vld [vmem:[%s1 + $0x30] sm:$0xff]
      %v298 = vld [vmem:[%s1 + $0x38] sm:$0xff]
      %v299 = vld [vmem:[%s1 + $0x40] sm:$0xff]
      %v300 = vld [vmem:[%s1 + $0x48] sm:$0xff]
      %v301 = vld [vmem:[%s1 + $0x50] sm:$0xff]
      %v302 = vld [vmem:[%s1 + $0x58] sm:$0xff]
      %v303 = vld [vmem:[%s1 + $0x60] sm:$0xff]
      %v304 = vld [vmem:[%s1 + $0x68] sm:$0xff]
      %v305 = vld [vmem:[%s1 + $0x70] sm:$0xff]
      %v306 = vld [vmem:[%s1 + $0x78] sm:$0xff]
      %308 = vset.pattern.permute.xlu0 0
      %309 = vperm.xlu0 %308, %v291
      %v310 = vpop.permute.xlu0 %309
      %313 = vset.pattern.permute.xlu0 0
      %314 = vperm.xlu0 %313, %v292
      %v315 = vpop.permute.xlu0 %314
      %318 = vset.pattern.permute.xlu0 0
      %319 = vperm.xlu0 %318, %v293
      %v320 = vpop.permute.xlu0 %319
      %323 = vset.pattern.permute.xlu0 0
      %324 = vperm.xlu0 %323, %v294
      %v325 = vpop.permute.xlu0 %324
      %328 = vset.pattern.permute.xlu0 0
      %329 = vperm.xlu0 %328, %v295
      %v330 = vpop.permute.xlu0 %329
      %333 = vset.pattern.permute.xlu0 0
      %334 = vperm.xlu0 %333, %v296
      %v335 = vpop.permute.xlu0 %334
      %338 = vset.pattern.permute.xlu0 0
      %339 = vperm.xlu0 %338, %v297
      %v340 = vpop.permute.xlu0 %339
      %343 = vset.pattern.permute.xlu0 0
      %344 = vperm.xlu0 %343, %v298
      %v345 = vpop.permute.xlu0 %344
      %348 = vset.pattern.permute.xlu0 0
      %349 = vperm.xlu0 %348, %v299
      %v350 = vpop.permute.xlu0 %349
      %353 = vset.pattern.permute.xlu0 0
      %354 = vperm.xlu0 %353, %v300
      %v355 = vpop.permute.xlu0 %354
      %358 = vset.pattern.permute.xlu0 0
      %359 = vperm.xlu0 %358, %v301
      %v360 = vpop.permute.xlu0 %359
      %363 = vset.pattern.permute.xlu0 0
      %364 = vperm.xlu0 %363, %v302
      %v365 = vpop.permute.xlu0 %364
      %368 = vset.pattern.permute.xlu0 0
      %369 = vperm.xlu0 %368, %v303
      %v370 = vpop.permute.xlu0 %369
      %373 = vset.pattern.permute.xlu0 0
      %374 = vperm.xlu0 %373, %v304
      %v375 = vpop.permute.xlu0 %374
      %378 = vset.pattern.permute.xlu0 0
      %379 = vperm.xlu0 %378, %v305
      %v380 = vpop.permute.xlu0 %379
      %383 = vset.pattern.permute.xlu0 0
      %384 = vperm.xlu0 %383, %v306
      %v385 = vpop.permute.xlu0 %384
      %vm387 = vcmask 261120
      %v389 = vsel %vm387, %v245, 0
      %v392 = vsel %vm387, %v248, 0
      %v395 = vsel %vm387, %v251, 0
      %v398 = vsel %vm387, %v254, 0
      %v401 = vsel %vm387, %v257, 0
      %v404 = vsel %vm387, %v260, 0
      %v407 = vsel %vm387, %v263, 0
      %v410 = vsel %vm387, %v266, 0
      %v413 = vsel %vm387, %v269, 0
      %v416 = vsel %vm387, %v272, 0
      %v419 = vsel %vm387, %v275, 0
      %v422 = vsel %vm387, %v278, 0
      %v425 = vsel %vm387, %v281, 0
      %v428 = vsel %vm387, %v284, 0
      %v431 = vsel %vm387, %v287, 0
      %v434 = vsel %vm387, %v290, 0
      %436 = vmatprep.subr.mxu0 %v202
      %437 = vmatpush1.msra.mxu0 %v201
      %438 = vmatprep.subr.mxu0 %v200
      %439 = vmatpush1.msra.mxu0 %v199
      %440 = vmatprep.subr.mxu0 %v198
      %441 = vmatpush1.msra.mxu0 %v197
      %442 = vmatprep.subr.mxu0 %v196
      %443 = vmatpush1.msra.mxu0 %v195
      %444 = vmatprep.subr.mxu0 %v194
      %445 = vmatpush1.msra.mxu0 %v193
      %446 = vmatprep.subr.mxu0 %v192
      %447 = vmatpush1.msra.mxu0 %v191
      %448 = vmatprep.subr.mxu0 %v190
      %449 = vmatpush1.msra.mxu0 %v189
      %450 = vmatprep.subr.mxu0 %v188
      %451 = vmatpush1.msra.mxu0 %v187
      %452 = vmatprep.subr.mxu0 %v186
      %453 = vmatpush1.msra.mxu0 %v185
      %454 = vmatprep.subr.mxu0 %v184
      %455 = vmatpush1.msra.mxu0 %v183
      %456 = vmatprep.subr.mxu0 %v182
      %457 = vmatpush1.msra.mxu0 %v181
      %458 = vmatprep.subr.mxu0 %v180
      %459 = vmatpush1.msra.mxu0 %v179
      %460 = vmatprep.subr.mxu0 %v178
      %461 = vmatpush1.msra.mxu0 %v177
      %462 = vmatprep.subr.mxu0 %v176
      %463 = vmatpush1.msra.mxu0 %v175
      %464 = vmatprep.subr.mxu0 %v174
      %465 = vmatpush1.msra.mxu0 %v173
      %466 = vmatprep.subr.mxu0 %v172
      %467 = vmatpush1.msra.mxu0 %v171
      %468 = vmatprep.subr.mxu0 %v234
      %469 = vmatpush2.msra.mxu0 %v233
      %470 = vmatprep.subr.mxu0 %v232
      %471 = vmatpush2.msra.mxu0 %v231
      %472 = vmatprep.subr.mxu0 %v230
      %473 = vmatpush2.msra.mxu0 %v229
      %474 = vmatprep.subr.mxu0 %v228
      %475 = vmatpush2.msra.mxu0 %v227
      %476 = vmatprep.subr.mxu0 %v226
      %477 = vmatpush2.msra.mxu0 %v225
      %478 = vmatprep.subr.mxu0 %v224
      %479 = vmatpush2.msra.mxu0 %v223
      %480 = vmatprep.subr.mxu0 %v222
      %481 = vmatpush2.msra.mxu0 %v221
      %482 = vmatprep.subr.mxu0 %v220
      %483 = vmatpush2.msra.mxu0 %v219
      %484 = vmatprep.subr.mxu0 %v218
      %485 = vmatpush2.msra.mxu0 %v217
      %486 = vmatprep.subr.mxu0 %v216
      %487 = vmatpush2.msra.mxu0 %v215
      %488 = vmatprep.subr.mxu0 %v214
      %489 = vmatpush2.msra.mxu0 %v213
      %490 = vmatprep.subr.mxu0 %v212
      %491 = vmatpush2.msra.mxu0 %v211
      %492 = vmatprep.subr.mxu0 %v210
      %493 = vmatpush2.msra.mxu0 %v209
      %494 = vmatprep.subr.mxu0 %v208
      %495 = vmatpush2.msra.mxu0 %v207
      %496 = vmatprep.subr.mxu0 %v206
      %497 = vmatpush2.msra.mxu0 %v205
      %498 = vmatprep.subr.mxu0 %v204
      %499 = vmatpush2.msra.mxu0 %v203
      %500 = vmatprep.mubr.f32.mxu0 %v244
      %501 = vmatmul.mubr.f32.gmra.mxu0 %v243
      %v502 = vpop.f32.mrf.mxu0
      %v503 = vadd.f32 %v310, %v502
      %v504 = vpop.f32.mrf.mxu0
      %v505 = vadd.f32 %v310, %v504
      %506 = vmatprep.mubr.f32.mxu0 %v247
      %507 = vmatmul.mubr.f32.gmra.mxu0 %v246
      %v508 = vpop.f32.mrf.mxu0
      %v509 = vadd.f32 %v315, %v508
      %v510 = vpop.f32.mrf.mxu0
      %v511 = vadd.f32 %v315, %v510
      %512 = vmatprep.mubr.f32.mxu0 %v250
      %513 = vmatmul.mubr.f32.gmra.mxu0 %v249
      %v514 = vpop.f32.mrf.mxu0
      %v515 = vadd.f32 %v320, %v514
      %v516 = vpop.f32.mrf.mxu0
      %v517 = vadd.f32 %v320, %v516
      %518 = vmatprep.mubr.f32.mxu0 %v253
      %519 = vmatmul.mubr.f32.gmra.mxu0 %v252
      %v520 = vpop.f32.mrf.mxu0
      %v521 = vadd.f32 %v325, %v520
      %v522 = vpop.f32.mrf.mxu0
      %v523 = vadd.f32 %v325, %v522
      %524 = vmatprep.mubr.f32.mxu0 %v256
      %525 = vmatmul.mubr.f32.gmra.mxu0 %v255
      %v526 = vpop.f32.mrf.mxu0
      %v527 = vadd.f32 %v330, %v526
      %v528 = vpop.f32.mrf.mxu0
      %v529 = vadd.f32 %v330, %v528
      %530 = vmatprep.mubr.f32.mxu0 %v259
      %531 = vmatmul.mubr.f32.gmra.mxu0 %v258
      %v532 = vpop.f32.mrf.mxu0
      %v533 = vadd.f32 %v335, %v532
      %v534 = vpop.f32.mrf.mxu0
      %v535 = vadd.f32 %v335, %v534
      %536 = vmatprep.mubr.f32.mxu0 %v262
      %537 = vmatmul.mubr.f32.gmra.mxu0 %v261
      %v538 = vpop.f32.mrf.mxu0
      %v539 = vadd.f32 %v340, %v538
      %v540 = vpop.f32.mrf.mxu0
      %v541 = vadd.f32 %v340, %v540
      %542 = vmatprep.mubr.f32.mxu0 %v265
      %543 = vmatmul.mubr.f32.gmra.mxu0 %v264
      %v544 = vpop.f32.mrf.mxu0
      %v545 = vadd.f32 %v345, %v544
      %v546 = vpop.f32.mrf.mxu0
      %v547 = vadd.f32 %v345, %v546
      %548 = vmatprep.mubr.f32.mxu0 %v268
      %549 = vmatmul.mubr.f32.gmra.mxu0 %v267
      %v550 = vpop.f32.mrf.mxu0
      %v551 = vadd.f32 %v350, %v550
      %v552 = vpop.f32.mrf.mxu0
      %v553 = vadd.f32 %v350, %v552
      %554 = vmatprep.mubr.f32.mxu0 %v271
      %555 = vmatmul.mubr.f32.gmra.mxu0 %v270
      %v556 = vpop.f32.mrf.mxu0
      %v557 = vadd.f32 %v355, %v556
      %v558 = vpop.f32.mrf.mxu0
      %v559 = vadd.f32 %v355, %v558
      %560 = vmatprep.mubr.f32.mxu0 %v274
      %561 = vmatmul.mubr.f32.gmra.mxu0 %v273
      %v562 = vpop.f32.mrf.mxu0
      %v563 = vadd.f32 %v360, %v562
      %v564 = vpop.f32.mrf.mxu0
      %v565 = vadd.f32 %v360, %v564
      %566 = vmatprep.mubr.f32.mxu0 %v277
      %567 = vmatmul.mubr.f32.gmra.mxu0 %v276
      %v568 = vpop.f32.mrf.mxu0
      %v569 = vadd.f32 %v365, %v568
      %v570 = vpop.f32.mrf.mxu0
      %v571 = vadd.f32 %v365, %v570
      %572 = vmatprep.mubr.f32.mxu0 %v280
      %573 = vmatmul.mubr.f32.gmra.mxu0 %v279
      %v574 = vpop.f32.mrf.mxu0
      %v575 = vadd.f32 %v370, %v574
      %v576 = vpop.f32.mrf.mxu0
      %v577 = vadd.f32 %v370, %v576
      %578 = vmatprep.mubr.f32.mxu0 %v283
      %579 = vmatmul.mubr.f32.gmra.mxu0 %v282
      %v580 = vpop.f32.mrf.mxu0
      %v581 = vadd.f32 %v375, %v580
      %v582 = vpop.f32.mrf.mxu0
      %v583 = vadd.f32 %v375, %v582
      %584 = vmatprep.mubr.f32.mxu0 %v286
      %585 = vmatmul.mubr.f32.gmra.mxu0 %v285
      %v586 = vpop.f32.mrf.mxu0
      %v587 = vadd.f32 %v380, %v586
      %v588 = vpop.f32.mrf.mxu0
      %v589 = vadd.f32 %v380, %v588
      %590 = vmatprep.mubr.f32.mxu0 %v289
      %591 = vmatmul.mubr.f32.gmra.mxu0 %v288
      %v592 = vpop.f32.mrf.mxu0
      %v593 = vadd.f32 %v385, %v592
      %v594 = vpop.f32.mrf.mxu0
      %v595 = vadd.f32 %v385, %v594
      %596 = vdwg.mxu0
      %597 = vmatprep.subr.mxu0 0.0
      %598 = vmatpush1.msra.mxu0 0.0
      %599 = vmatprep.subr.mxu0 0.0
      %600 = vmatpush1.msra.mxu0 0.0
      %601 = vmatprep.subr.mxu0 0.0
      %602 = vmatpush1.msra.mxu0 0.0
      %603 = vmatprep.subr.mxu0 0.0
      %604 = vmatpush1.msra.mxu0 0.0
      %605 = vmatprep.subr.mxu0 0.0
      %606 = vmatpush1.msra.mxu0 0.0
      %607 = vmatprep.subr.mxu0 0.0
      %608 = vmatpush1.msra.mxu0 0.0
      %609 = vmatprep.subr.mxu0 0.0
      %610 = vmatpush1.msra.mxu0 0.0
      %611 = vmatprep.subr.mxu0 0.0
      %612 = vmatpush1.msra.mxu0 0.0
      %613 = vmatprep.subr.mxu0 0.0
      %614 = vmatpush1.msra.mxu0 0.0
      %615 = vmatprep.subr.mxu0 0.0
      %616 = vmatpush1.msra.mxu0 0.0
      %617 = vmatprep.subr.mxu0 0.0
      %618 = vmatpush1.msra.mxu0 0.0
      %619 = vmatprep.subr.mxu0 0.0
      %620 = vmatpush1.msra.mxu0 0.0
      %621 = vmatprep.subr.mxu0 %v242
      %622 = vmatpush1.msra.mxu0 %v241
      %623 = vmatprep.subr.mxu0 %v240
      %624 = vmatpush1.msra.mxu0 %v239
      %625 = vmatprep.subr.mxu0 %v238
      %626 = vmatpush1.msra.mxu0 %v237
      %627 = vmatprep.subr.mxu0 %v236
      %628 = vmatpush1.msra.mxu0 %v235
      %629 = vmatprep.subr.mxu0 0.0
      %630 = vmatpush2.msra.mxu0 0.0
      %631 = vmatprep.subr.mxu0 0.0
      %632 = vmatpush2.msra.mxu0 0.0
      %633 = vmatprep.subr.mxu0 0.0
      %634 = vmatpush2.msra.mxu0 0.0
      %635 = vmatprep.subr.mxu0 0.0
      %636 = vmatpush2.msra.mxu0 0.0
      %637 = vmatprep.subr.mxu0 0.0
      %638 = vmatpush2.msra.mxu0 0.0
      %639 = vmatprep.subr.mxu0 0.0
      %640 = vmatpush2.msra.mxu0 0.0
      %641 = vmatprep.subr.mxu0 0.0
      %642 = vmatpush2.msra.mxu0 0.0
      %643 = vmatprep.subr.mxu0 0.0
      %644 = vmatpush2.msra.mxu0 0.0
      %645 = vmatprep.subr.mxu0 0.0
      %646 = vmatpush2.msra.mxu0 0.0
      %647 = vmatprep.subr.mxu0 0.0
      %648 = vmatpush2.msra.mxu0 0.0
      %649 = vmatprep.subr.mxu0 0.0
      %650 = vmatpush2.msra.mxu0 0.0
      %651 = vmatprep.subr.mxu0 0.0
      %652 = vmatpush2.msra.mxu0 0.0
      %653 = vmatprep.subr.mxu0 0.0
      %654 = vmatpush2.msra.mxu0 0.0
      %655 = vmatprep.subr.mxu0 0.0
      %656 = vmatpush2.msra.mxu0 0.0
      %657 = vmatprep.subr.mxu0 0.0
      %658 = vmatpush2.msra.mxu0 0.0
      %659 = vmatprep.subr.mxu0 0.0
      %660 = vmatpush2.msra.mxu0 0.0
      %661 = vmatprep.mubr.f32.mxu0 0.0
      %662 = vmatmul.mubr.f32.gmra.mxu0 %v389
      %v663 = vpop.f32.mrf.mxu0
      %v664 = vadd.f32 %v503, %v663
      %v665 = vpop.f32.mrf.mxu0
      %v666 = vadd.f32 %v505, %v665
      %667 = vmatprep.mubr.f32.mxu0 0.0
      %668 = vmatmul.mubr.f32.gmra.mxu0 %v392
      %v669 = vpop.f32.mrf.mxu0
      %v670 = vadd.f32 %v509, %v669
      %v671 = vpop.f32.mrf.mxu0
      %v672 = vadd.f32 %v511, %v671
      %673 = vmatprep.mubr.f32.mxu0 0.0
      %674 = vmatmul.mubr.f32.gmra.mxu0 %v395
      %v675 = vpop.f32.mrf.mxu0
      %v676 = vadd.f32 %v515, %v675
      %v677 = vpop.f32.mrf.mxu0
      %v678 = vadd.f32 %v517, %v677
      %679 = vmatprep.mubr.f32.mxu0 0.0
      %680 = vmatmul.mubr.f32.gmra.mxu0 %v398
      %v681 = vpop.f32.mrf.mxu0
      %v682 = vadd.f32 %v521, %v681
      %v683 = vpop.f32.mrf.mxu0
      %v684 = vadd.f32 %v523, %v683
      %685 = vmatprep.mubr.f32.mxu0 0.0
      %686 = vmatmul.mubr.f32.gmra.mxu0 %v401
      %v687 = vpop.f32.mrf.mxu0
      %v688 = vadd.f32 %v527, %v687
      %v689 = vpop.f32.mrf.mxu0
      %v690 = vadd.f32 %v529, %v689
      %691 = vmatprep.mubr.f32.mxu0 0.0
      %692 = vmatmul.mubr.f32.gmra.mxu0 %v404
      %v693 = vpop.f32.mrf.mxu0
      %v694 = vadd.f32 %v533, %v693
      %v695 = vpop.f32.mrf.mxu0
      %v696 = vadd.f32 %v535, %v695
      %697 = vmatprep.mubr.f32.mxu0 0.0
      %698 = vmatmul.mubr.f32.gmra.mxu0 %v407
      %v699 = vpop.f32.mrf.mxu0
      %v700 = vadd.f32 %v539, %v699
      %v701 = vpop.f32.mrf.mxu0
      %v702 = vadd.f32 %v541, %v701
      %703 = vmatprep.mubr.f32.mxu0 0.0
      %704 = vmatmul.mubr.f32.gmra.mxu0 %v410
      %v705 = vpop.f32.mrf.mxu0
      %v706 = vadd.f32 %v545, %v705
      %v707 = vpop.f32.mrf.mxu0
      %v708 = vadd.f32 %v547, %v707
      %709 = vmatprep.mubr.f32.mxu0 0.0
      %710 = vmatmul.mubr.f32.gmra.mxu0 %v413
      %v711 = vpop.f32.mrf.mxu0
      %v712 = vadd.f32 %v551, %v711
      %v713 = vpop.f32.mrf.mxu0
      %v714 = vadd.f32 %v553, %v713
      %715 = vmatprep.mubr.f32.mxu0 0.0
      %716 = vmatmul.mubr.f32.gmra.mxu0 %v416
      %v717 = vpop.f32.mrf.mxu0
      %v718 = vadd.f32 %v557, %v717
      %v719 = vpop.f32.mrf.mxu0
      %v720 = vadd.f32 %v559, %v719
      %721 = vmatprep.mubr.f32.mxu0 0.0
      %722 = vmatmul.mubr.f32.gmra.mxu0 %v419
      %v723 = vpop.f32.mrf.mxu0
      %v724 = vadd.f32 %v563, %v723
      %v725 = vpop.f32.mrf.mxu0
      %v726 = vadd.f32 %v565, %v725
      %727 = vmatprep.mubr.f32.mxu0 0.0
      %728 = vmatmul.mubr.f32.gmra.mxu0 %v422
      %v729 = vpop.f32.mrf.mxu0
      %v730 = vadd.f32 %v569, %v729
      %v731 = vpop.f32.mrf.mxu0
      %v732 = vadd.f32 %v571, %v731
      %733 = vmatprep.mubr.f32.mxu0 0.0
      %734 = vmatmul.mubr.f32.gmra.mxu0 %v425
      %v735 = vpop.f32.mrf.mxu0
      %v736 = vadd.f32 %v575, %v735
      %v737 = vpop.f32.mrf.mxu0
      %v738 = vadd.f32 %v577, %v737
      %739 = vmatprep.mubr.f32.mxu0 0.0
      %740 = vmatmul.mubr.f32.gmra.mxu0 %v428
      %v741 = vpop.f32.mrf.mxu0
      %v742 = vadd.f32 %v581, %v741
      %v743 = vpop.f32.mrf.mxu0
      %v744 = vadd.f32 %v583, %v743
      %745 = vmatprep.mubr.f32.mxu0 0.0
      %746 = vmatmul.mubr.f32.gmra.mxu0 %v431
      %v747 = vpop.f32.mrf.mxu0
      %v748 = vadd.f32 %v587, %v747
      %v749 = vpop.f32.mrf.mxu0
      %v750 = vadd.f32 %v589, %v749
      %751 = vmatprep.mubr.f32.mxu0 0.0
      %752 = vmatmul.mubr.f32.gmra.mxu0 %v434
      %v753 = vpop.f32.mrf.mxu0
      %v754 = vadd.f32 %v593, %v753
      %v755 = vpop.f32.mrf.mxu0
      %v756 = vadd.f32 %v595, %v755
      %757 = vdwg.mxu0
      %v758 = vxor.u32 %v712, 2147483648
      %v759 = vxor.u32 %v714, 2147483648
      %v760 = vxor.u32 %v718, 2147483648
      %v761 = vxor.u32 %v720, 2147483648
      %v762 = vxor.u32 %v724, 2147483648
      %v763 = vxor.u32 %v726, 2147483648
      %v764 = vxor.u32 %v730, 2147483648
      %v765 = vxor.u32 %v732, 2147483648
      %v766 = vxor.u32 %v736, 2147483648
      %v767 = vxor.u32 %v738, 2147483648
      %v768 = vxor.u32 %v742, 2147483648
      %v769 = vxor.u32 %v744, 2147483648
      %v770 = vxor.u32 %v748, 2147483648
      %v771 = vxor.u32 %v750, 2147483648
      %v772 = vxor.u32 %v754, 2147483648
      %v773 = vxor.u32 %v756, 2147483648
      %v774 = vmul.f32 %v758, 1.442695
      %v775 = vpow.pop %v774
      %v776 = vmul.f32 %v759, 1.442695
      %v777 = vpow.pop %v776
      %v778 = vmul.f32 %v760, 1.442695
      %v779 = vpow.pop %v778
      %v780 = vmul.f32 %v761, 1.442695
      %v781 = vpow.pop %v780
      %v782 = vmul.f32 %v762, 1.442695
      %v783 = vpow.pop %v782
      %v784 = vmul.f32 %v763, 1.442695
      %v785 = vpow.pop %v784
      %v786 = vmul.f32 %v764, 1.442695
      %v787 = vpow.pop %v786
      %v788 = vmul.f32 %v765, 1.442695
      %v789 = vpow.pop %v788
      %v790 = vmul.f32 %v766, 1.442695
      %v791 = vpow.pop %v790
      %v792 = vmul.f32 %v767, 1.442695
      %v793 = vpow.pop %v792
      %v794 = vmul.f32 %v768, 1.442695
      %v795 = vpow.pop %v794
      %v796 = vmul.f32 %v769, 1.442695
      %v797 = vpow.pop %v796
      %v798 = vmul.f32 %v770, 1.442695
      %v799 = vpow.pop %v798
      %v800 = vmul.f32 %v771, 1.442695
      %v801 = vpow.pop %v800
      %v802 = vmul.f32 %v772, 1.442695
      %v803 = vpow.pop %v802
      %v804 = vmul.f32 %v773, 1.442695
      %v805 = vpow.pop %v804
      %v806 = vadd.f32 %v775, 1.0
      %v807 = vadd.f32 %v777, 1.0
      %v808 = vadd.f32 %v779, 1.0
      %v809 = vadd.f32 %v781, 1.0
      %v810 = vadd.f32 %v783, 1.0
      %v811 = vadd.f32 %v785, 1.0
      %v812 = vadd.f32 %v787, 1.0
      %v813 = vadd.f32 %v789, 1.0
      %v814 = vadd.f32 %v791, 1.0
      %v815 = vadd.f32 %v793, 1.0
      %v816 = vadd.f32 %v795, 1.0
      %v817 = vadd.f32 %v797, 1.0
      %v818 = vadd.f32 %v799, 1.0
      %v819 = vadd.f32 %v801, 1.0
      %v820 = vadd.f32 %v803, 1.0
      %v821 = vadd.f32 %v805, 1.0
      %v822 = vrcp.pop %v806
      %v823 = vmul.f32 1.0, %v822
      %v824 = vrcp.pop %v807
      %v825 = vmul.f32 1.0, %v824
      %v826 = vrcp.pop %v808
      %v827 = vmul.f32 1.0, %v826
      %v828 = vrcp.pop %v809
      %v829 = vmul.f32 1.0, %v828
      %v830 = vrcp.pop %v810
      %v831 = vmul.f32 1.0, %v830
      %v832 = vrcp.pop %v811
      %v833 = vmul.f32 1.0, %v832
      %v834 = vrcp.pop %v812
      %v835 = vmul.f32 1.0, %v834
      %v836 = vrcp.pop %v813
      %v837 = vmul.f32 1.0, %v836
      %v838 = vrcp.pop %v814
      %v839 = vmul.f32 1.0, %v838
      %v840 = vrcp.pop %v815
      %v841 = vmul.f32 1.0, %v840
      %v842 = vrcp.pop %v816
      %v843 = vmul.f32 1.0, %v842
      %v844 = vrcp.pop %v817
      %v845 = vmul.f32 1.0, %v844
      %v846 = vrcp.pop %v818
      %v847 = vmul.f32 1.0, %v846
      %v848 = vrcp.pop %v819
      %v849 = vmul.f32 1.0, %v848
      %v850 = vrcp.pop %v820
      %v851 = vmul.f32 1.0, %v850
      %v852 = vrcp.pop %v821
      %v853 = vmul.f32 1.0, %v852
      %v854 = vmul.f32 %v664, %v823
      %v855 = vmul.f32 %v666, %v825
      %v856 = vmul.f32 %v670, %v827
      %v857 = vmul.f32 %v672, %v829
      %v858 = vmul.f32 %v676, %v831
      %v859 = vmul.f32 %v678, %v833
      %v860 = vmul.f32 %v682, %v835
      %v861 = vmul.f32 %v684, %v837
      %v862 = vmul.f32 %v688, %v839
      %v863 = vmul.f32 %v690, %v841
      %v864 = vmul.f32 %v694, %v843
      %v865 = vmul.f32 %v696, %v845
      %v866 = vmul.f32 %v700, %v847
      %v867 = vmul.f32 %v702, %v849
      %v868 = vmul.f32 %v706, %v851
      %v869 = vmul.f32 %v708, %v853
      %870 = vst [vmem:[%s170] sm:$0xff] %v854
      %871 = vst [vmem:[%s170 + $0x8] sm:$0xff] %v855
      %872 = vst [vmem:[%s170 + $0x10] sm:$0xff] %v856
      %873 = vst [vmem:[%s170 + $0x18] sm:$0xff] %v857
      %874 = vst [vmem:[%s170 + $0x20] sm:$0xff] %v858
      %875 = vst [vmem:[%s170 + $0x28] sm:$0xff] %v859
      %876 = vst [vmem:[%s170 + $0x30] sm:$0xff] %v860
      %877 = vst [vmem:[%s170 + $0x38] sm:$0xff] %v861
      %878 = vst [vmem:[%s170 + $0x40] sm:$0xff] %v862
      %879 = vst [vmem:[%s170 + $0x48] sm:$0xff] %v863
      %880 = vst [vmem:[%s170 + $0x50] sm:$0xff] %v864
      %881 = vst [vmem:[%s170 + $0x58] sm:$0xff] %v865
      %882 = vst [vmem:[%s170 + $0x60] sm:$0xff] %v866
      %883 = vst [vmem:[%s170 + $0x68] sm:$0xff] %v867
      %884 = vst [vmem:[%s170 + $0x70] sm:$0xff] %v868
      %885 = vst [vmem:[%s170 + $0x78] sm:$0xff] %v869
      %p886 = scmp.lt.s32.totalorder %s14, 1
      %s887 = scalar_select %p886, %s14, 1
      %s888 = smul.addr %s887, 16
      %s889 = smul.addr %s888, 8
      %s890 = scalar_lea.vmem %s3, %s889
      // Predicated region
      $region33: #{encoder.5} parent=31 // pred_check
        %p891 = pneg %p100
      $region34: #{encoder.5} parent=31 // pred_check_branch
        %893 = sbr.rel (%p891) target = $region36
      $region35: #{encoder.5} parent=31 // pred_region
        _
      $region36: #{encoder.5} parent=31 // pred_fallthru
        _
    $region32: #{encoder.5} parent=5 // pred_fallthru
      _
    %p894 = scmp.le.s32.totalorder 2, %s9
    // Predicated region
    $region37: #{encoder.5} parent=5 // pred_check
      %p895 = pneg %p894
    $region38: #{encoder.5} parent=5 // pred_check_branch
      %897 = sbr.rel (%p895) target = $region40
    $region39: #{encoder.5} parent=5 // pred_region
      %s898 = ssub.s32 %s9, 2
      // Predicated region
      $region41: #{encoder.5} parent=39 // pred_check
        %p899 = pneg %p106
      $region42: #{encoder.5} parent=39 // pred_check_branch
        %901 = sbr.rel (%p899) target = $region44
      $region43: #{encoder.5} parent=39 // pred_region
        %p902 = scmp.lt.s32.totalorder %s15, 1
        %s903 = scalar_select %p902, %s15, 1
        %s904 = smul.addr %s903, 16
        %s905 = smul.addr %s904, 8
        %s906 = scalar_lea.vmem %s3, %s905
      $region44: #{encoder.5} parent=39 // pred_fallthru
        _
    $region40: #{encoder.5} parent=5 // pred_fallthru
      _
  $region6: #{encoder.5} parent=0 // loop_footer
    %s13 = sadd.s32 1, %s9
  $region7: #{encoder.5} parent=0 // loop_footer_branch
    %8 = sbr.rel target = $region3
  $region8: #{encoder.5} parent=0 // loop_exit
    _

</llo_original>
